<compile_context>
chip_gen: v6e
topology: v6e:2x2x1
jax: 0.10.0
libtpu: 0.0.40
codegen_flags: <defaults>
</compile_context>

<pallas_src>
import numpy as np
import jax
import jax.numpy as jnp
from jax import lax
from jax.experimental import pallas as pl
from jax.experimental.pallas import tpu as pltpu


def char_lstm_kernel(x_ref, wx_ref, wh_ref, b_ref, out_ref, gx, h, c):
    # x_ref   : (B, D, rows)     packed embeddings; column = l*t_tile + tt
    # wx_ref  : (8H, D)          fused [i_f,i_b,f_f,f_b,g_f,g_b,o_f,o_b] rows
    # wh_ref  : (8H, 2H)         block-diagonal fused recurrent weights
    # b_ref   : (8H, 1)          fused bias (f32)
    # out_ref : (B, 2H, t_tile)  f32 output block
    # gx      : (B, 8H, rows)    precomputed input projections (scratch)
    # h, c    : (2H, rows)       f32 LSTM state; rows [0:H]=fwd, [H:2H]=bwd
    B = out_ref.shape[0]
    t_tile = out_ref.shape[2]
    H2, rows = h.shape              # H2 = 2H, rows = L * t_tile (lane axis)
    H = H2 // 2
    last = rows - t_tile            # first lane of char lane L-1

    # Fresh hidden/cell state per word-position tile (init_char_lstm_hidden()).
    h[...] = jnp.zeros_like(h)
    c[...] = jnp.zeros_like(c)

    wx = wx_ref[...]
    wh = wh_ref[...]
    bias = b_ref[...]

    # Fused fwd+bwd input projection for every recurrence step, outside the
    # serial loop, bias folded in.  One (8H, D) @ (D, rows) MXU push per word.
    for b in range(B):
        gx[b] = (jnp.dot(wx, x_ref[b], preferred_element_type=jnp.float32)
                 + bias).astype(gx.dtype)

    def step(b, carry):
        # Single block-diagonal recurrent matmul covering both directions.
        gates = gx[b].astype(jnp.float32) + jnp.dot(
            wh, h[...].astype(wh.dtype), preferred_element_type=jnp.float32)
        # Gate row blocks: [i | f | g | o], each (2H, rows); within a block the
        # fwd direction is rows [0:H], bwd rows [H:2H].  Sublane slices at
        # multiples of 8 -> whole vregs, lane-dense VPU/EUP work.
        i_g = 0.5 * jnp.tanh(0.5 * gates[0 * H2:1 * H2, :]) + 0.5
        f_g = 0.5 * jnp.tanh(0.5 * gates[1 * H2:2 * H2, :]) + 0.5
        g_g = jnp.tanh(gates[2 * H2:3 * H2, :])
        o_g = 0.5 * jnp.tanh(0.5 * gates[3 * H2:4 * H2, :]) + 0.5
        c_new = f_g * c[...] + i_g * g_g
        h_new = o_g * jnp.tanh(c_new)
        c[...] = c_new
        h[...] = h_new
        # PyTorch `out[:, -1]`: forward -> char lane L-1.  The backward LSTM is
        # fed the SAME (unreversed) lanes here, so its "last" lane is lane 0.
        out_ref[pl.ds(b, 1), pl.ds(0, H), :] = h_new[0:H, last:][None]
        out_ref[pl.ds(b, 1), pl.ds(H, H), :] = h_new[H:H2, 0:t_tile][None]
        return carry

    lax.fori_loop(0, B, step, 0, unroll=min(B, 8))


def _vmem_bytes(B, L, H, D, t_tile, in_bytes, gx_bytes):
    rows = L * t_tile
    return (2 * B * D * rows * in_bytes            # input block, double-buffered
            + 2 * B * 2 * H * t_tile * 4           # output block, double-buffered
            + B * 8 * H * rows * gx_bytes          # gx scratch
            + 2 * 2 * H * rows * 4                 # h, c state
            + 2 * 8 * H * (D + 2 * H + 1) * 4)     # weights + bias (generous)


def _choose_t_tile(T, B, L, H, D, *, in_bytes, gx_bytes,
                   vmem_budget_bytes=20 * 2**20):
    """Largest divisor of T fitting the VMEM budget; prefer >=2 grid steps so
    the grid can be sharded across both v7x TensorCores."""
    divisors = [d for d in range(1, T + 1) if T % d == 0]
    fits = [d for d in divisors
            if _vmem_bytes(B, L, H, D, d, in_bytes, gx_bytes) <= vmem_budget_bytes]
    if not fits:
        fits = [1]
    t_tile = max(fits)
    multi = [d for d in fits if T // d >= 2]
    if multi:
        t_tile = max(multi)
    return t_tile


def char_lstm_forward(char_id_seq, params, *, compute_dtype=jnp.float32,
                      t_tile=None):
    """char_id_seq: int32 (seq_len, batch, max_char_len). Returns (T, B, 2H) f32."""
    T, B, L = char_id_seq.shape
    emb = params["embed"]
    D = emb.shape[1]
    H = params["w_hh_f"].shape[0]

    in_bytes = jnp.dtype(compute_dtype).itemsize
    gx_dtype = jnp.float32 if compute_dtype == jnp.float32 else compute_dtype
    gx_bytes = jnp.dtype(gx_dtype).itemsize

    if t_tile is None:
        t_tile = _choose_t_tile(T, B, L, H, D,
                                in_bytes=in_bytes, gx_bytes=gx_bytes)
    assert T % t_tile == 0, "t_tile must divide seq_len"
    G = T // t_tile
    rows = L * t_tile

    # Embedding lookup (gather) + layout packing are plain-JAX glue; the LSTM
    # recurrence (matmuls + gated elementwise) is the Pallas hot path.
    # NOTE: no reversed-char copy — the backward direction reuses these lanes.
    e = emb.astype(compute_dtype)[char_id_seq]            # (T, B, L, D)
    x = (e.reshape(G, t_tile, B, L, D)
          .transpose(0, 2, 4, 3, 1)                       # (G, B, D, L, t_tile)
          .reshape(G, B, D, rows))                        # col = l*t_tile + tt

    # Fused weights, gate-row blocks ordered [i_f,i_b,f_f,f_b,g_f,g_b,o_f,o_b].
    def gate_blocks(w, n_in):                              # (n_in,4H) -> (4,H,n_in)
        return w.T.reshape(4, H, n_in)

    wxf = gate_blocks(params["w_ih_f"], D)
    wxb = gate_blocks(params["w_ih_b"], D)
    w_x = jnp.stack([wxf, wxb], axis=1).reshape(8 * H, D).astype(compute_dtype)

    whf = gate_blocks(params["w_hh_f"], H)
    whb = gate_blocks(params["w_hh_b"], H)
    zero = jnp.zeros_like(whf)
    w_h = jnp.stack([jnp.concatenate([whf, zero], axis=2),     # fwd rows use h_f
                     jnp.concatenate([zero, whb], axis=2)],    # bwd rows use h_b
                    axis=1).reshape(8 * H, 2 * H).astype(compute_dtype)

    bias = jnp.stack([params["b_f"].reshape(4, H),
                      params["b_b"].reshape(4, H)],
                     axis=1).reshape(8 * H)[:, None].astype(jnp.float32)

    est = _vmem_bytes(B, L, H, D, t_tile, in_bytes, gx_bytes)
    vmem_limit = int(min(64 * 2**20, max(32 * 2**20, 2 * est)))

    out = pl.pallas_call(
        char_lstm_kernel,
        out_shape=jax.ShapeDtypeStruct((G, B, 2 * H, t_tile), jnp.float32),
        grid_spec=pltpu.PrefetchScalarGridSpec(
            num_scalar_prefetch=0,
            grid=(G,),
            in_specs=[
                pl.BlockSpec((None, B, D, rows), lambda g: (g, 0, 0, 0)),
                pl.BlockSpec((8 * H, D), lambda g: (0, 0)),
                pl.BlockSpec((8 * H, 2 * H), lambda g: (0, 0)),
                pl.BlockSpec((8 * H, 1), lambda g: (0, 0)),
            ],
            out_specs=pl.BlockSpec((None, B, 2 * H, t_tile),
                                   lambda g: (g, 0, 0, 0)),
            scratch_shapes=[
                pltpu.VMEM((B, 8 * H, rows), gx_dtype),   # gx (input projections)
                pltpu.VMEM((2 * H, rows), jnp.float32),   # h
                pltpu.VMEM((2 * H, rows), jnp.float32),   # c
            ],
        ),
        compiler_params=pltpu.CompilerParams(
            dimension_semantics=("parallel",),
            vmem_limit_bytes=vmem_limit),
    )(x, w_x, w_h, bias)

    # (G, B, 2H, t_tile) -> (T, B, 2H)
    return out.transpose(0, 3, 1, 2).reshape(T, B, 2 * H)


def char_lstm_reference(char_id_seq, params):
    """Pure-JAX reference mirroring the PyTorch forward exactly (f32)."""
    emb = params["embed"]
    T, B, L = char_id_seq.shape
    H = params["w_hh_f"].shape[0]

    def run_lstm(e, wi, wh, b):
        # e: (B, L, D); time axis = B, "batch" lanes = L (as in the PyTorch code)
        def cell(carry, x):
            h, c = carry
            gates = x @ wi + h @ wh + b
            i = jax.nn.sigmoid(gates[:, 0:H])
            f = jax.nn.sigmoid(gates[:, H:2 * H])
            g = jnp.tanh(gates[:, 2 * H:3 * H])
            o = jax.nn.sigmoid(gates[:, 3 * H:4 * H])
            c = f * c + i * g
            h = o * jnp.tanh(c)
            return (h, c), h
        init = (jnp.zeros((L, H), jnp.float32), jnp.zeros((L, H), jnp.float32))
        _, hs = lax.scan(cell, init, e)
        return hs                               # (B, L, H)

    outs = []
    for t in range(T):
        ef = emb[char_id_seq[t]]
        eb = emb[char_id_seq[t][:, ::-1]]
        hf = run_lstm(ef, params["w_ih_f"], params["w_hh_f"], params["b_f"][0])
        hb = run_lstm(eb, params["w_ih_b"], params["w_hh_b"], params["b_b"][0])
        outs.append(jnp.concatenate([hf[:, -1], hb[:, -1]], axis=1))
    return jnp.stack(outs, axis=0)


if __name__ == "__main__":
    # Small shapes consistent with the module's forward.
    V, D, H = 50, 16, 32           # char_vocab_dim, char_embed_dim, char_lstm_dim
    T, B, L = 4, 2, 8              # seq_len, batch_size, max_char_len

    key = jax.random.PRNGKey(0)
    ks = jax.random.split(key, 8)
    scale = 1.0 / np.sqrt(H)
    params = {
        # Embedding ~ N(0,1) as in nn.Embedding default.
        "embed": jax.random.normal(ks[0], (V, D), jnp.float32),
        # LSTM weights ~ U(-1/sqrt(H), 1/sqrt(H)); stored pre-transposed,
        # biases stored as (b_ih + b_hh) combined, shape (1, 4H).
        "w_ih_f": jax.random.uniform(ks[1], (D, 4 * H), jnp.float32, -scale, scale),
        "w_hh_f": jax.random.uniform(ks[2], (H, 4 * H), jnp.float32, -scale, scale),
        "b_f":    jax.random.uniform(ks[3], (1, 4 * H), jnp.float32, -scale, scale),
        "w_ih_b": jax.random.uniform(ks[4], (D, 4 * H), jnp.float32, -scale, scale),
        "w_hh_b": jax.random.uniform(ks[5], (H, 4 * H), jnp.float32, -scale, scale),
        "b_b":    jax.random.uniform(ks[6], (1, 4 * H), jnp.float32, -scale, scale),
    }
    char_id_seq = jax.random.randint(ks[7], (T, B, L), 0, V, dtype=jnp.int32)

    ref = char_lstm_reference(char_id_seq, params)

    # f32 path: exact-semantics check against the PyTorch-equivalent reference.
    out = jax.block_until_ready(char_lstm_forward(char_id_seq, params))
    assert out.shape == (T, B, 2 * H)
    np.testing.assert_allclose(np.asarray(out), np.asarray(ref),
                               atol=2e-3, rtol=2e-3)

    # bf16 matmul-operand path (v6e/v7x MXU-friendly); gate accumulation,
    # biases and the h/c state stay f32.
    out_bf16 = jax.block_until_ready(
        char_lstm_forward(char_id_seq, params, compute_dtype=jnp.bfloat16))
    np.testing.assert_allclose(np.asarray(out_bf16), np.asarray(ref),
                               atol=5e-2, rtol=5e-2)

    print("KERNEL_OK")
</pallas_src>

<mosaic_0001>
module attributes {stable_mosaic.version = 11 : i64} {
  func.func @char_lstm_kernel(%arg0: i32, %arg1: memref<1x2x16x16xf32, #tpu.memory_space<vmem>>, %arg2: memref<256x16xf32, #tpu.memory_space<vmem>>, %arg3: memref<256x64xf32, #tpu.memory_space<vmem>>, %arg4: memref<256x1xf32, #tpu.memory_space<vmem>>, %arg5: memref<1x2x64x2xf32, #tpu.memory_space<vmem>>, %arg6: memref<2x256x16xf32, #tpu.memory_space<vmem>>, %arg7: memref<64x16xf32, #tpu.memory_space<vmem>>, %arg8: memref<64x16xf32, #tpu.memory_space<vmem>>) attributes {dimension_semantics = [#tpu.dimension_semantics<parallel>], iteration_bounds = array<i64: 2>, scalar_prefetch = 0 : i64, scratch_operands = 3 : i64, tpu.core_type = #tpu.core_type<tc>, window_params = [{transform_indices = @transform_0, window_bounds = array<i64: 1, 2, 16, 16>}, {pipeline_mode = #tpu.pipeline_mode<synchronous>, transform_indices = @transform_1, window_bounds = array<i64: 256, 16>}, {pipeline_mode = #tpu.pipeline_mode<synchronous>, transform_indices = @transform_2, window_bounds = array<i64: 256, 64>}, {pipeline_mode = #tpu.pipeline_mode<synchronous>, transform_indices = @transform_3, window_bounds = array<i64: 256, 1>}, {transform_indices = @transform_4, window_bounds = array<i64: 1, 2, 64, 2>}]} {
    %cst = arith.constant 0.000000e+00 : f32
    %0 = vector.broadcast %cst : f32 to vector<64x16xf32>
    %c0 = arith.constant 0 : index
    %c0_0 = arith.constant 0 : index
    %1 = vector.load %arg7[%c0, %c0_0] : memref<64x16xf32, #tpu.memory_space<vmem>>, vector<64x16xf32>
    tpu.vector_store %arg7[%c0, %c0_0], %0 {strides = array<i32>} : memref<64x16xf32, #tpu.memory_space<vmem>>, vector<64x16xf32>,
    %cst_1 = arith.constant 0.000000e+00 : f32
    %2 = vector.broadcast %cst_1 : f32 to vector<64x16xf32>
    %c0_2 = arith.constant 0 : index
    %c0_3 = arith.constant 0 : index
    %3 = vector.load %arg8[%c0_2, %c0_3] : memref<64x16xf32, #tpu.memory_space<vmem>>, vector<64x16xf32>
    tpu.vector_store %arg8[%c0_2, %c0_3], %2 {strides = array<i32>} : memref<64x16xf32, #tpu.memory_space<vmem>>, vector<64x16xf32>,
    %c0_4 = arith.constant 0 : index
    %c0_5 = arith.constant 0 : index
    %4 = vector.load %arg2[%c0_4, %c0_5] : memref<256x16xf32, #tpu.memory_space<vmem>>, vector<256x16xf32>
    %c0_6 = arith.constant 0 : index
    %c0_7 = arith.constant 0 : index
    %5 = vector.load %arg3[%c0_6, %c0_7] : memref<256x64xf32, #tpu.memory_space<vmem>>, vector<256x64xf32>
    %c0_8 = arith.constant 0 : index
    %c0_9 = arith.constant 0 : index
    %6 = vector.load %arg4[%c0_8, %c0_9] : memref<256x1xf32, #tpu.memory_space<vmem>>, vector<256x1xf32>
    %c0_10 = arith.constant 0 : index
    %c0_11 = arith.constant 0 : index
    %c0_12 = arith.constant 0 : index
    %c0_13 = arith.constant 0 : index
    %7 = vector.load %arg1[%c0_10, %c0_11, %c0_12, %c0_13] : memref<1x2x16x16xf32, #tpu.memory_space<vmem>>, vector<1x1x16x16xf32>
    %8 = vector.shape_cast %7 : vector<1x1x16x16xf32> to vector<16x16xf32>
    %cst_14 = arith.constant dense<0.000000e+00> : vector<256x16xf32>
    %9 = tpu.matmul %4, %8, %cst_14 {dimension_numbers = #tpu.dot_dimension_numbers<[1], [0], [0], [1], [0, 0, 1, 1], [], []>} : vector<256x16xf32>, vector<16x16xf32>, vector<256x16xf32> -> vector<256x16xf32>
    %10 = vector.broadcast %6 : vector<256x1xf32> to vector<256x16xf32>
    %11 = arith.addf %9, %10 : vector<256x16xf32>
    %c0_15 = arith.constant 0 : index
    %c0_16 = arith.constant 0 : index
    %c0_17 = arith.constant 0 : index
    %12 = vector.load %arg6[%c0_15, %c0_16, %c0_17] : memref<2x256x16xf32, #tpu.memory_space<vmem>>, vector<1x256x16xf32>
    %13 = vector.shape_cast %12 : vector<1x256x16xf32> to vector<256x16xf32>
    %14 = vector.shape_cast %11 : vector<256x16xf32> to vector<1x256x16xf32>
    tpu.vector_store %arg6[%c0_15, %c0_16, %c0_17], %14 {strides = array<i32>} : memref<2x256x16xf32, #tpu.memory_space<vmem>>, vector<1x256x16xf32>,
    %c0_18 = arith.constant 0 : index
    %c1 = arith.constant 1 : index
    %c0_19 = arith.constant 0 : index
    %c0_20 = arith.constant 0 : index
    %15 = vector.load %arg1[%c0_18, %c1, %c0_19, %c0_20] : memref<1x2x16x16xf32, #tpu.memory_space<vmem>>, vector<1x1x16x16xf32>
    %16 = vector.shape_cast %15 : vector<1x1x16x16xf32> to vector<16x16xf32>
    %cst_21 = arith.constant dense<0.000000e+00> : vector<256x16xf32>
    %17 = tpu.matmul %4, %16, %cst_21 {dimension_numbers = #tpu.dot_dimension_numbers<[1], [0], [0], [1], [0, 0, 1, 1], [], []>} : vector<256x16xf32>, vector<16x16xf32>, vector<256x16xf32> -> vector<256x16xf32>
    %18 = vector.broadcast %6 : vector<256x1xf32> to vector<256x16xf32>
    %19 = arith.addf %17, %18 : vector<256x16xf32>
    %c1_22 = arith.constant 1 : index
    %c0_23 = arith.constant 0 : index
    %c0_24 = arith.constant 0 : index
    %20 = vector.load %arg6[%c1_22, %c0_23, %c0_24] : memref<2x256x16xf32, #tpu.memory_space<vmem>>, vector<1x256x16xf32>
    %21 = vector.shape_cast %20 : vector<1x256x16xf32> to vector<256x16xf32>
    %22 = vector.shape_cast %19 : vector<256x16xf32> to vector<1x256x16xf32>
    tpu.vector_store %arg6[%c1_22, %c0_23, %c0_24], %22 {strides = array<i32>} : memref<2x256x16xf32, #tpu.memory_space<vmem>>, vector<1x256x16xf32>,
    %c0_i32 = arith.constant 0 : i32
    %23 = arith.index_cast %c0_i32 : i32 to index
    %c0_25 = arith.constant 0 : index
    %c0_26 = arith.constant 0 : index
    %24 = vector.load %arg6[%23, %c0_25, %c0_26] : memref<2x256x16xf32, #tpu.memory_space<vmem>>, vector<1x256x16xf32>
    %25 = vector.shape_cast %24 : vector<1x256x16xf32> to vector<256x16xf32>
    %c0_27 = arith.constant 0 : index
    %c0_28 = arith.constant 0 : index
    %26 = vector.load %arg7[%c0_27, %c0_28] : memref<64x16xf32, #tpu.memory_space<vmem>>, vector<64x16xf32>
    %cst_29 = arith.constant dense<0.000000e+00> : vector<256x16xf32>
    %27 = tpu.matmul %5, %26, %cst_29 {dimension_numbers = #tpu.dot_dimension_numbers<[1], [0], [0], [1], [0, 0, 1, 1], [], []>} : vector<256x64xf32>, vector<64x16xf32>, vector<256x16xf32> -> vector<256x16xf32>
    %28 = arith.addf %25, %27 : vector<256x16xf32>
    %29 = vector.extract_strided_slice %28 {offsets = [0, 0], sizes = [64, 16], strides = [1, 1]} : vector<256x16xf32> to vector<64x16xf32>
    %cst_30 = arith.constant 5.000000e-01 : f32
    %30 = vector.broadcast %cst_30 : f32 to vector<64x16xf32>
    %31 = arith.mulf %30, %29 : vector<64x16xf32>
    %32 = math.tanh %31 : vector<64x16xf32>
    %cst_31 = arith.constant 5.000000e-01 : f32
    %33 = vector.broadcast %cst_31 : f32 to vector<64x16xf32>
    %34 = arith.mulf %33, %32 : vector<64x16xf32>
    %cst_32 = arith.constant 5.000000e-01 : f32
    %35 = vector.broadcast %cst_32 : f32 to vector<64x16xf32>
    %36 = arith.addf %34, %35 : vector<64x16xf32>
    %37 = vector.extract_strided_slice %28 {offsets = [64, 0], sizes = [64, 16], strides = [1, 1]} : vector<256x16xf32> to vector<64x16xf32>
    %cst_33 = arith.constant 5.000000e-01 : f32
    %38 = vector.broadcast %cst_33 : f32 to vector<64x16xf32>
    %39 = arith.mulf %38, %37 : vector<64x16xf32>
    %40 = math.tanh %39 : vector<64x16xf32>
    %cst_34 = arith.constant 5.000000e-01 : f32
    %41 = vector.broadcast %cst_34 : f32 to vector<64x16xf32>
    %42 = arith.mulf %41, %40 : vector<64x16xf32>
    %cst_35 = arith.constant 5.000000e-01 : f32
    %43 = vector.broadcast %cst_35 : f32 to vector<64x16xf32>
    %44 = arith.addf %42, %43 : vector<64x16xf32>
    %45 = vector.extract_strided_slice %28 {offsets = [128, 0], sizes = [64, 16], strides = [1, 1]} : vector<256x16xf32> to vector<64x16xf32>
    %46 = math.tanh %45 : vector<64x16xf32>
    %47 = vector.extract_strided_slice %28 {offsets = [192, 0], sizes = [64, 16], strides = [1, 1]} : vector<256x16xf32> to vector<64x16xf32>
    %cst_36 = arith.constant 5.000000e-01 : f32
    %48 = vector.broadcast %cst_36 : f32 to vector<64x16xf32>
    %49 = arith.mulf %48, %47 : vector<64x16xf32>
    %50 = math.tanh %49 : vector<64x16xf32>
    %cst_37 = arith.constant 5.000000e-01 : f32
    %51 = vector.broadcast %cst_37 : f32 to vector<64x16xf32>
    %52 = arith.mulf %51, %50 : vector<64x16xf32>
    %cst_38 = arith.constant 5.000000e-01 : f32
    %53 = vector.broadcast %cst_38 : f32 to vector<64x16xf32>
    %54 = arith.addf %52, %53 : vector<64x16xf32>
    %c0_39 = arith.constant 0 : index
    %c0_40 = arith.constant 0 : index
    %55 = vector.load %arg8[%c0_39, %c0_40] : memref<64x16xf32, #tpu.memory_space<vmem>>, vector<64x16xf32>
    %56 = arith.mulf %44, %55 : vector<64x16xf32>
    %57 = arith.mulf %36, %46 : vector<64x16xf32>
    %58 = arith.addf %56, %57 : vector<64x16xf32>
    %59 = math.tanh %58 : vector<64x16xf32>
    %60 = arith.mulf %54, %59 : vector<64x16xf32>
    %c0_41 = arith.constant 0 : index
    %c0_42 = arith.constant 0 : index
    %61 = vector.load %arg8[%c0_41, %c0_42] : memref<64x16xf32, #tpu.memory_space<vmem>>, vector<64x16xf32>
    tpu.vector_store %arg8[%c0_41, %c0_42], %58 {strides = array<i32>} : memref<64x16xf32, #tpu.memory_space<vmem>>, vector<64x16xf32>,
    %c0_43 = arith.constant 0 : index
    %c0_44 = arith.constant 0 : index
    %62 = vector.load %arg7[%c0_43, %c0_44] : memref<64x16xf32, #tpu.memory_space<vmem>>, vector<64x16xf32>
    tpu.vector_store %arg7[%c0_43, %c0_44], %60 {strides = array<i32>} : memref<64x16xf32, #tpu.memory_space<vmem>>, vector<64x16xf32>,
    %63 = vector.extract_strided_slice %60 {offsets = [0, 14], sizes = [32, 2], strides = [1, 1]} : vector<64x16xf32> to vector<32x2xf32>
    %64 = vector.shape_cast %63 : vector<32x2xf32> to vector<1x32x2xf32>
    %c0_45 = arith.constant 0 : index
    %65 = arith.index_cast %c0_i32 : i32 to index
    %c0_46 = arith.constant 0 : index
    %c0_47 = arith.constant 0 : index
    %66 = vector.load %arg5[%c0_45, %65, %c0_46, %c0_47] : memref<1x2x64x2xf32, #tpu.memory_space<vmem>>, vector<1x1x32x2xf32>
    %67 = vector.shape_cast %66 : vector<1x1x32x2xf32> to vector<1x32x2xf32>
    %68 = vector.shape_cast %64 : vector<1x32x2xf32> to vector<1x1x32x2xf32>
    tpu.vector_store %arg5[%c0_45, %65, %c0_46, %c0_47], %68 {strides = array<i32>} : memref<1x2x64x2xf32, #tpu.memory_space<vmem>>, vector<1x1x32x2xf32>,
    %69 = vector.extract_strided_slice %60 {offsets = [32, 0], sizes = [32, 2], strides = [1, 1]} : vector<64x16xf32> to vector<32x2xf32>
    %70 = vector.shape_cast %69 : vector<32x2xf32> to vector<1x32x2xf32>
    %c0_48 = arith.constant 0 : index
    %71 = arith.index_cast %c0_i32 : i32 to index
    %c32 = arith.constant 32 : index
    %c0_49 = arith.constant 0 : index
    %72 = vector.load %arg5[%c0_48, %71, %c32, %c0_49] : memref<1x2x64x2xf32, #tpu.memory_space<vmem>>, vector<1x1x32x2xf32>
    %73 = vector.shape_cast %72 : vector<1x1x32x2xf32> to vector<1x32x2xf32>
    %74 = vector.shape_cast %70 : vector<1x32x2xf32> to vector<1x1x32x2xf32>
    tpu.vector_store %arg5[%c0_48, %71, %c32, %c0_49], %74 {strides = array<i32>} : memref<1x2x64x2xf32, #tpu.memory_space<vmem>>, vector<1x1x32x2xf32>,
    %c1_i32 = arith.constant 1 : i32
    %75 = arith.index_cast %c1_i32 : i32 to index
    %c0_50 = arith.constant 0 : index
    %c0_51 = arith.constant 0 : index
    %76 = vector.load %arg6[%75, %c0_50, %c0_51] : memref<2x256x16xf32, #tpu.memory_space<vmem>>, vector<1x256x16xf32>
    %77 = vector.shape_cast %76 : vector<1x256x16xf32> to vector<256x16xf32>
    %c0_52 = arith.constant 0 : index
    %c0_53 = arith.constant 0 : index
    %78 = vector.load %arg7[%c0_52, %c0_53] : memref<64x16xf32, #tpu.memory_space<vmem>>, vector<64x16xf32>
    %cst_54 = arith.constant dense<0.000000e+00> : vector<256x16xf32>
    %79 = tpu.matmul %5, %78, %cst_54 {dimension_numbers = #tpu.dot_dimension_numbers<[1], [0], [0], [1], [0, 0, 1, 1], [], []>} : vector<256x64xf32>, vector<64x16xf32>, vector<256x16xf32> -> vector<256x16xf32>
    %80 = arith.addf %77, %79 : vector<256x16xf32>
    %81 = vector.extract_strided_slice %80 {offsets = [0, 0], sizes = [64, 16], strides = [1, 1]} : vector<256x16xf32> to vector<64x16xf32>
    %cst_55 = arith.constant 5.000000e-01 : f32
    %82 = vector.broadcast %cst_55 : f32 to vector<64x16xf32>
    %83 = arith.mulf %82, %81 : vector<64x16xf32>
    %84 = math.tanh %83 : vector<64x16xf32>
    %cst_56 = arith.constant 5.000000e-01 : f32
    %85 = vector.broadcast %cst_56 : f32 to vector<64x16xf32>
    %86 = arith.mulf %85, %84 : vector<64x16xf32>
    %cst_57 = arith.constant 5.000000e-01 : f32
    %87 = vector.broadcast %cst_57 : f32 to vector<64x16xf32>
    %88 = arith.addf %86, %87 : vector<64x16xf32>
    %89 = vector.extract_strided_slice %80 {offsets = [64, 0], sizes = [64, 16], strides = [1, 1]} : vector<256x16xf32> to vector<64x16xf32>
    %cst_58 = arith.constant 5.000000e-01 : f32
    %90 = vector.broadcast %cst_58 : f32 to vector<64x16xf32>
    %91 = arith.mulf %90, %89 : vector<64x16xf32>
    %92 = math.tanh %91 : vector<64x16xf32>
    %cst_59 = arith.constant 5.000000e-01 : f32
    %93 = vector.broadcast %cst_59 : f32 to vector<64x16xf32>
    %94 = arith.mulf %93, %92 : vector<64x16xf32>
    %cst_60 = arith.constant 5.000000e-01 : f32
    %95 = vector.broadcast %cst_60 : f32 to vector<64x16xf32>
    %96 = arith.addf %94, %95 : vector<64x16xf32>
    %97 = vector.extract_strided_slice %80 {offsets = [128, 0], sizes = [64, 16], strides = [1, 1]} : vector<256x16xf32> to vector<64x16xf32>
    %98 = math.tanh %97 : vector<64x16xf32>
    %99 = vector.extract_strided_slice %80 {offsets = [192, 0], sizes = [64, 16], strides = [1, 1]} : vector<256x16xf32> to vector<64x16xf32>
    %cst_61 = arith.constant 5.000000e-01 : f32
    %100 = vector.broadcast %cst_61 : f32 to vector<64x16xf32>
    %101 = arith.mulf %100, %99 : vector<64x16xf32>
    %102 = math.tanh %101 : vector<64x16xf32>
    %cst_62 = arith.constant 5.000000e-01 : f32
    %103 = vector.broadcast %cst_62 : f32 to vector<64x16xf32>
    %104 = arith.mulf %103, %102 : vector<64x16xf32>
    %cst_63 = arith.constant 5.000000e-01 : f32
    %105 = vector.broadcast %cst_63 : f32 to vector<64x16xf32>
    %106 = arith.addf %104, %105 : vector<64x16xf32>
    %c0_64 = arith.constant 0 : index
    %c0_65 = arith.constant 0 : index
    %107 = vector.load %arg8[%c0_64, %c0_65] : memref<64x16xf32, #tpu.memory_space<vmem>>, vector<64x16xf32>
    %108 = arith.mulf %96, %107 : vector<64x16xf32>
    %109 = arith.mulf %88, %98 : vector<64x16xf32>
    %110 = arith.addf %108, %109 : vector<64x16xf32>
    %111 = math.tanh %110 : vector<64x16xf32>
    %112 = arith.mulf %106, %111 : vector<64x16xf32>
    %c0_66 = arith.constant 0 : index
    %c0_67 = arith.constant 0 : index
    %113 = vector.load %arg8[%c0_66, %c0_67] : memref<64x16xf32, #tpu.memory_space<vmem>>, vector<64x16xf32>
    tpu.vector_store %arg8[%c0_66, %c0_67], %110 {strides = array<i32>} : memref<64x16xf32, #tpu.memory_space<vmem>>, vector<64x16xf32>,
    %c0_68 = arith.constant 0 : index
    %c0_69 = arith.constant 0 : index
    %114 = vector.load %arg7[%c0_68, %c0_69] : memref<64x16xf32, #tpu.memory_space<vmem>>, vector<64x16xf32>
    tpu.vector_store %arg7[%c0_68, %c0_69], %112 {strides = array<i32>} : memref<64x16xf32, #tpu.memory_space<vmem>>, vector<64x16xf32>,
    %115 = vector.extract_strided_slice %112 {offsets = [0, 14], sizes = [32, 2], strides = [1, 1]} : vector<64x16xf32> to vector<32x2xf32>
    %116 = vector.shape_cast %115 : vector<32x2xf32> to vector<1x32x2xf32>
    %c0_70 = arith.constant 0 : index
    %117 = arith.index_cast %c1_i32 : i32 to index
    %c0_71 = arith.constant 0 : index
    %c0_72 = arith.constant 0 : index
    %118 = vector.load %arg5[%c0_70, %117, %c0_71, %c0_72] : memref<1x2x64x2xf32, #tpu.memory_space<vmem>>, vector<1x1x32x2xf32>
    %119 = vector.shape_cast %118 : vector<1x1x32x2xf32> to vector<1x32x2xf32>
    %120 = vector.shape_cast %116 : vector<1x32x2xf32> to vector<1x1x32x2xf32>
    tpu.vector_store %arg5[%c0_70, %117, %c0_71, %c0_72], %120 {strides = array<i32>} : memref<1x2x64x2xf32, #tpu.memory_space<vmem>>, vector<1x1x32x2xf32>,
    %121 = vector.extract_strided_slice %112 {offsets = [32, 0], sizes = [32, 2], strides = [1, 1]} : vector<64x16xf32> to vector<32x2xf32>
    %122 = vector.shape_cast %121 : vector<32x2xf32> to vector<1x32x2xf32>
    %c0_73 = arith.constant 0 : index
    %123 = arith.index_cast %c1_i32 : i32 to index
    %c32_74 = arith.constant 32 : index
    %c0_75 = arith.constant 0 : index
    %124 = vector.load %arg5[%c0_73, %123, %c32_74, %c0_75] : memref<1x2x64x2xf32, #tpu.memory_space<vmem>>, vector<1x1x32x2xf32>
    %125 = vector.shape_cast %124 : vector<1x1x32x2xf32> to vector<1x32x2xf32>
    %126 = vector.shape_cast %122 : vector<1x32x2xf32> to vector<1x1x32x2xf32>
    tpu.vector_store %arg5[%c0_73, %123, %c32_74, %c0_75], %126 {strides = array<i32>} : memref<1x2x64x2xf32, #tpu.memory_space<vmem>>, vector<1x1x32x2xf32>,
    %c2_i32 = arith.constant 2 : i32
    return
  }
  func.func @transform_0(%arg0: i32) -> (i32, i32, i32, i32) {
    %c0_i32 = arith.constant 0 : i32
    %c0_i32_0 = arith.constant 0 : i32
    %c0_i32_1 = arith.constant 0 : i32
    %c0_i32_2 = arith.constant 0 : i32
    return %arg0, %c0_i32, %c0_i32_0, %c0_i32_1 : i32, i32, i32, i32
  }
  func.func @transform_1(%arg0: i32) -> (i32, i32) {
    %c0_i32 = arith.constant 0 : i32
    %c0_i32_0 = arith.constant 0 : i32
    %c0_i32_1 = arith.constant 0 : i32
    return %c0_i32, %c0_i32_0 : i32, i32
  }
  func.func @transform_2(%arg0: i32) -> (i32, i32) {
    %c0_i32 = arith.constant 0 : i32
    %c0_i32_0 = arith.constant 0 : i32
    %c0_i32_1 = arith.constant 0 : i32
    return %c0_i32, %c0_i32_0 : i32, i32
  }
  func.func @transform_3(%arg0: i32) -> (i32, i32) {
    %c0_i32 = arith.constant 0 : i32
    %c0_i32_0 = arith.constant 0 : i32
    %c0_i32_1 = arith.constant 0 : i32
    return %c0_i32, %c0_i32_0 : i32, i32
  }
  func.func @transform_4(%arg0: i32) -> (i32, i32, i32, i32) {
    %c0_i32 = arith.constant 0 : i32
    %c0_i32_0 = arith.constant 0 : i32
    %c0_i32_1 = arith.constant 0 : i32
    %c0_i32_2 = arith.constant 0 : i32
    return %arg0, %c0_i32, %c0_i32_0, %c0_i32_1 : i32, i32, i32, i32
  }
}

</mosaic_0001>

<llo_original>
// kernel: tpu_custom_call.1
$region0: #{tpu_custom_call.1}
  #allocation0 [shape = 'u32[]', space=smem, size = 0x4, offset = 0x4, fixed_abs, tag = 'smem constant byte address 0x4 - core index']
  #allocation1 [shape = 'u32[144,128]{1,0:T(1,128)}', space=vmem, size = 0x12000, scoped, tag = 'internal scratch']
  #allocation2 [shape = 'f32[2,256,16]{2,1,0:T(8,128)}', space=vmem, size = 0x40000, scoped, tag = 'scratch operand']
  #allocation3 [shape = 'f32[64,16]{1,0:T(8,128)}', space=vmem, size = 0x8000, scoped, tag = 'scratch operand']
  #allocation4 [shape = 'f32[64,16]{1,0:T(8,128)}', space=vmem, size = 0x8000, scoped, tag = 'scratch operand']
  %s0 = inlined_call_operand.vmem [shape: f32[2,2,16,16], index: 0, kind: input, shape index: {}]
  %s1 = inlined_call_operand.vmem [shape: f32[256,16], index: 1, kind: input, shape index: {}]
  %s2 = inlined_call_operand.vmem [shape: f32[256,64], index: 2, kind: input, shape index: {}]
  %s3 = inlined_call_operand.vmem [shape: f32[256,1], index: 3, kind: input, shape index: {}]
  %s4 = inlined_call_operand.vmem [shape: f32[2,2,64,2], index: 4, kind: output, shape index: {}]
  %s5 = sld [smem:[#allocation0]]
  $region49: #{tpu_custom_call.1} parent=0
    _
  %s7 = ssub.s32 1, %s5
  %s8 = scalar_select 0, %s7, %s5
  loop: start=0, step=1, limit=4
  $region2: #{tpu_custom_call.1} parent=0 // loop_pre_header
    _
  $region3: #{tpu_custom_call.1} parent=0 // loop_header
    %s10 = sphi 0, %s14
    %p11 = scmp.ge.s32.totalorder %s10, 4
    %s20 = sphi 0, %s22
    %s23 = sphi 0, %s20
    %s24 = sphi 0, %s23
    %s40 = sphi 0, %s24
    %s44 = sphi 0, %s44
    %s46 = sphi 0, %s44
    %s47 = sphi 0, %s46
    %s61 = sphi 0, %s47
    %s65 = sphi 0, %s65
    %s67 = sphi 0, %s65
    %s68 = sphi 0, %s67
    %s82 = sphi 0, %s68
    %s86 = sphi 0, %s86
    %s88 = sphi 0, %s86
    %s89 = sphi 0, %s88
    %s103 = sphi 0, %s89
    %s109 = sphi 0, %s111
    %s112 = sphi 0, %s109
    %s113 = sphi 0, %s112
    %s129 = sphi 0, %s113
  $region4: #{tpu_custom_call.1} parent=0 // loop_header_branch
    %13 = sbr.rel (%p11) target = $region8
  $region5: #{tpu_custom_call.1} parent=0 // loop_body
    %s15 = ssub.s32 %s10, 1
    %s16 = ssub.s32 %s10, 2
    %s17 = sadd.s32 %s10, 1
    %s18 = ssub.s32 %s10, %s17
    %p19 = scmp.eq.s32.totalorder %s18, 0
    %s21 = sadd.s32 %s20, 1
    %s22 = scalar_select %p19, %s20, %s21
    %p25 = pneg %p19
    %p26 = scmp.eq.s32.totalorder %s10, 1
    %p27 = por %p25, %p26
    %p28 = scmp.ne.s32.totalorder %s20, %s23
    %p29 = scmp.eq.s32.totalorder %s10, 0
    %p30 = por %p28, %p29
    %p31 = scmp.ne.s32.totalorder %s20, %s23
    %p32 = scmp.eq.s32.totalorder %s15, 1
    %p33 = por %p31, %p32
    %p34 = scmp.ne.s32.totalorder %s23, %s24
    %p35 = scmp.eq.s32.totalorder %s15, 0
    %p36 = por %p34, %p35
    %p37 = scmp.ne.s32.totalorder %s23, %s24
    %p38 = scmp.eq.s32.totalorder %s16, 1
    %p39 = por %p37, %p38
    %p41 = scmp.ne.s32.totalorder %s24, %s40
    %p42 = scmp.eq.s32.totalorder %s16, 0
    %p43 = por %p41, %p42
    %s45 = sadd.s32 %s44, 1
    %p48 = scmp.eq.s32.totalorder %s10, 1
    %p49 = scmp.ne.s32.totalorder %s44, %s46
    %p50 = scmp.eq.s32.totalorder %s10, 0
    %p51 = por %p49, %p50
    %p52 = scmp.ne.s32.totalorder %s44, %s46
    %p53 = scmp.eq.s32.totalorder %s15, 1
    %p54 = por %p52, %p53
    %p55 = scmp.ne.s32.totalorder %s46, %s47
    %p56 = scmp.eq.s32.totalorder %s15, 0
    %p57 = por %p55, %p56
    %p58 = scmp.ne.s32.totalorder %s46, %s47
    %p59 = scmp.eq.s32.totalorder %s16, 1
    %p60 = por %p58, %p59
    %p62 = scmp.ne.s32.totalorder %s47, %s61
    %p63 = scmp.eq.s32.totalorder %s16, 0
    %p64 = por %p62, %p63
    %s66 = sadd.s32 %s65, 1
    %p69 = scmp.eq.s32.totalorder %s10, 1
    %p70 = scmp.ne.s32.totalorder %s65, %s67
    %p71 = scmp.eq.s32.totalorder %s10, 0
    %p72 = por %p70, %p71
    %p73 = scmp.ne.s32.totalorder %s65, %s67
    %p74 = scmp.eq.s32.totalorder %s15, 1
    %p75 = por %p73, %p74
    %p76 = scmp.ne.s32.totalorder %s67, %s68
    %p77 = scmp.eq.s32.totalorder %s15, 0
    %p78 = por %p76, %p77
    %p79 = scmp.ne.s32.totalorder %s67, %s68
    %p80 = scmp.eq.s32.totalorder %s16, 1
    %p81 = por %p79, %p80
    %p83 = scmp.ne.s32.totalorder %s68, %s82
    %p84 = scmp.eq.s32.totalorder %s16, 0
    %p85 = por %p83, %p84
    %s87 = sadd.s32 %s86, 1
    %p90 = scmp.eq.s32.totalorder %s10, 1
    %p91 = scmp.ne.s32.totalorder %s86, %s88
    %p92 = scmp.eq.s32.totalorder %s10, 0
    %p93 = por %p91, %p92
    %p94 = scmp.ne.s32.totalorder %s86, %s88
    %p95 = scmp.eq.s32.totalorder %s15, 1
    %p96 = por %p94, %p95
    %p97 = scmp.ne.s32.totalorder %s88, %s89
    %p98 = scmp.eq.s32.totalorder %s15, 0
    %p99 = por %p97, %p98
    %p100 = scmp.ne.s32.totalorder %s88, %s89
    %p101 = scmp.eq.s32.totalorder %s16, 1
    %p102 = por %p100, %p101
    %p104 = scmp.ne.s32.totalorder %s89, %s103
    %p105 = scmp.eq.s32.totalorder %s16, 0
    %p106 = por %p104, %p105
    %s107 = ssub.s32 %s10, %s17
    %p108 = scmp.eq.s32.totalorder %s107, 0
    %s110 = sadd.s32 %s109, 1
    %s111 = scalar_select %p108, %s109, %s110
    %p114 = pneg %p108
    %p115 = scmp.eq.s32.totalorder %s10, 1
    %p116 = por %p114, %p115
    %p117 = scmp.ne.s32.totalorder %s109, %s112
    %p118 = scmp.eq.s32.totalorder %s10, 0
    %p119 = por %p117, %p118
    %p120 = scmp.ne.s32.totalorder %s109, %s112
    %p121 = scmp.eq.s32.totalorder %s15, 1
    %p122 = por %p120, %p121
    %p123 = scmp.ne.s32.totalorder %s112, %s113
    %p124 = scmp.eq.s32.totalorder %s15, 0
    %p125 = por %p123, %p124
    %p126 = scmp.ne.s32.totalorder %s112, %s113
    %p127 = scmp.eq.s32.totalorder %s16, 1
    %p128 = por %p126, %p127
    %p130 = scmp.ne.s32.totalorder %s113, %s129
    %p131 = scmp.eq.s32.totalorder %s16, 0
    %p132 = por %p130, %p131
    %p133 = scmp.le.s32.totalorder 1, %s10
    %p134 = scmp.lt.s32.totalorder %s10, 3
    %p135 = pnand %p133, %p134
    %p136 = pneg %p135
    // Predicated region
    $region9: #{tpu_custom_call.1} parent=5 // pred_check
      _
    $region10: #{tpu_custom_call.1} parent=5 // pred_check_branch
      %138 = sbr.rel (%p135) target = $region12
    $region11: #{tpu_custom_call.1} parent=5 // pred_region
      %s139 = ssub.s32 %s10, 1
      // Predicated region
      $region13: #{tpu_custom_call.1} parent=11 // pred_check
        %p140 = pneg %p57
      $region14: #{tpu_custom_call.1} parent=11 // pred_check_branch
        %142 = sbr.rel (%p140) target = $region16
      $region15: #{tpu_custom_call.1} parent=11 // pred_region
        _
      $region16: #{tpu_custom_call.1} parent=11 // pred_fallthru
        _
      // Predicated region
      $region17: #{tpu_custom_call.1} parent=11 // pred_check
        %p143 = pneg %p78
      $region18: #{tpu_custom_call.1} parent=11 // pred_check_branch
        %145 = sbr.rel (%p143) target = $region20
      $region19: #{tpu_custom_call.1} parent=11 // pred_region
        _
      $region20: #{tpu_custom_call.1} parent=11 // pred_fallthru
        _
      // Predicated region
      $region21: #{tpu_custom_call.1} parent=11 // pred_check
        %p146 = pneg %p99
      $region22: #{tpu_custom_call.1} parent=11 // pred_check_branch
        %148 = sbr.rel (%p146) target = $region24
      $region23: #{tpu_custom_call.1} parent=11 // pred_region
        _
      $region24: #{tpu_custom_call.1} parent=11 // pred_fallthru
        _
    $region12: #{tpu_custom_call.1} parent=5 // pred_fallthru
      _
    %p149 = scmp.lt.s32.totalorder %s10, 2
    // Predicated region
    $region25: #{tpu_custom_call.1} parent=5 // pred_check
      %p150 = pneg %p149
    $region26: #{tpu_custom_call.1} parent=5 // pred_check_branch
      %152 = sbr.rel (%p150) target = $region28
    $region27: #{tpu_custom_call.1} parent=5 // pred_region
      // Predicated region
      $region29: #{tpu_custom_call.1} parent=27 // pred_check
        %p153 = pneg %p30
      $region30: #{tpu_custom_call.1} parent=27 // pred_check_branch
        %155 = sbr.rel (%p153) target = $region32
      $region31: #{tpu_custom_call.1} parent=27 // pred_region
        %p156 = scmp.lt.s32.totalorder %s10, 1
        %s157 = scalar_select %p156, %s10, 1
        %s158 = smul.addr %s157, 4
        %s159 = smul.addr %s158, 8
        %s160 = scalar_lea.vmem %s0, %s159
      $region32: #{tpu_custom_call.1} parent=27 // pred_fallthru
        _
    $region28: #{tpu_custom_call.1} parent=5 // pred_fallthru
      _
    %p161 = scmp.le.s32.totalorder 1, %s10
    %p162 = scmp.lt.s32.totalorder %s10, 3
    %p163 = pnand %p161, %p162
    %p164 = pneg %p163
    // Predicated region
    $region33: #{tpu_custom_call.1} parent=5 // pred_check
      _
    $region34: #{tpu_custom_call.1} parent=5 // pred_check_branch
      %166 = sbr.rel (%p163) target = $region36
    $region35: #{tpu_custom_call.1} parent=5 // pred_region
      %s167 = ssub.s32 %s10, 1
      %p168 = scmp.lt.s32.totalorder %s15, 1
      %s169 = scalar_select %p168, %s15, 1
      %s170 = smul.addr %s169, 4
      %s171 = smul.addr %s170, 8
      %s172 = scalar_lea.vmem %s0, %s171
      %p173 = pneg %p36
      %p174 = pneg %p33
      %p175 = pneg %p57
      %p176 = pneg %p54
      %p177 = pneg %p78
      %p178 = pneg %p75
      %p179 = pneg %p99
      %p180 = pneg %p96
      %p181 = pneg %p125
      %p182 = pneg %p122
      %p183 = scmp.lt.s32.totalorder %s15, 1
      %s184 = scalar_select %p183, %s15, 1
      %s185 = smul.addr %s184, 16
      %s186 = smul.addr %s185, 8
      %s187 = scalar_lea.vmem %s4, %s186
      %p188 = scmp.lt.s32.totalorder %s15, 1
      %s189 = scalar_select %p188, %s15, 1
      %s190 = smul.addr %s189, 4
      %s191 = smul.addr %s190, 8
      %s192 = scalar_lea.vmem %s0, %s191
      %p193 = scmp.lt.s32.totalorder %s15, 1
      %s194 = scalar_select %p193, %s15, 1
      %s195 = smul.addr %s194, 16
      %s196 = smul.addr %s195, 8
      %s197 = scalar_lea.vmem %s4, %s196
      %vm198 = vcmask 130048
      %199 = vst.msk [vmem:[#allocation3] sm:$0xff] %vm198, 0.0
      %200 = vst.msk [vmem:[#allocation3 + $0x8] sm:$0xff] %vm198, 0.0
      %201 = vst.msk [vmem:[#allocation3 + $0x10] sm:$0xff] %vm198, 0.0
      %202 = vst.msk [vmem:[#allocation3 + $0x18] sm:$0xff] %vm198, 0.0
      %203 = vst.msk [vmem:[#allocation3 + $0x20] sm:$0xff] %vm198, 0.0
      %204 = vst.msk [vmem:[#allocation3 + $0x28] sm:$0xff] %vm198, 0.0
      %205 = vst.msk [vmem:[#allocation3 + $0x30] sm:$0xff] %vm198, 0.0
      %206 = vst.msk [vmem:[#allocation3 + $0x38] sm:$0xff] %vm198, 0.0
      %207 = vst.msk [vmem:[#allocation4] sm:$0xff] %vm198, 0.0
      %208 = vst.msk [vmem:[#allocation4 + $0x8] sm:$0xff] %vm198, 0.0
      %209 = vst.msk [vmem:[#allocation4 + $0x10] sm:$0xff] %vm198, 0.0
      %210 = vst.msk [vmem:[#allocation4 + $0x18] sm:$0xff] %vm198, 0.0
      %211 = vst.msk [vmem:[#allocation4 + $0x20] sm:$0xff] %vm198, 0.0
      %212 = vst.msk [vmem:[#allocation4 + $0x28] sm:$0xff] %vm198, 0.0
      %213 = vst.msk [vmem:[#allocation4 + $0x30] sm:$0xff] %vm198, 0.0
      %214 = vst.msk [vmem:[#allocation4 + $0x38] sm:$0xff] %vm198, 0.0
      %v215 = vld [vmem:[%s1] sm:$0xff]
      %v216 = vld [vmem:[%s1 + $0x8] sm:$0xff]
      %v217 = vld [vmem:[%s1 + $0x10] sm:$0xff]
      %v218 = vld [vmem:[%s1 + $0x18] sm:$0xff]
      %v219 = vld [vmem:[%s1 + $0x20] sm:$0xff]
      %v220 = vld [vmem:[%s1 + $0x28] sm:$0xff]
      %v221 = vld [vmem:[%s1 + $0x30] sm:$0xff]
      %v222 = vld [vmem:[%s1 + $0x38] sm:$0xff]
      %v223 = vld [vmem:[%s1 + $0x40] sm:$0xff]
      %v224 = vld [vmem:[%s1 + $0x48] sm:$0xff]
      %v225 = vld [vmem:[%s1 + $0x50] sm:$0xff]
      %v226 = vld [vmem:[%s1 + $0x58] sm:$0xff]
      %v227 = vld [vmem:[%s1 + $0x60] sm:$0xff]
      %v228 = vld [vmem:[%s1 + $0x68] sm:$0xff]
      %v229 = vld [vmem:[%s1 + $0x70] sm:$0xff]
      %v230 = vld [vmem:[%s1 + $0x78] sm:$0xff]
      %v231 = vld [vmem:[%s1 + $0x80] sm:$0xff]
      %v232 = vld [vmem:[%s1 + $0x88] sm:$0xff]
      %v233 = vld [vmem:[%s1 + $0x90] sm:$0xff]
      %v234 = vld [vmem:[%s1 + $0x98] sm:$0xff]
      %v235 = vld [vmem:[%s1 + $0xa0] sm:$0xff]
      %v236 = vld [vmem:[%s1 + $0xa8] sm:$0xff]
      %v237 = vld [vmem:[%s1 + $0xb0] sm:$0xff]
      %v238 = vld [vmem:[%s1 + $0xb8] sm:$0xff]
      %v239 = vld [vmem:[%s1 + $0xc0] sm:$0xff]
      %v240 = vld [vmem:[%s1 + $0xc8] sm:$0xff]
      %v241 = vld [vmem:[%s1 + $0xd0] sm:$0xff]
      %v242 = vld [vmem:[%s1 + $0xd8] sm:$0xff]
      %v243 = vld [vmem:[%s1 + $0xe0] sm:$0xff]
      %v244 = vld [vmem:[%s1 + $0xe8] sm:$0xff]
      %v245 = vld [vmem:[%s1 + $0xf0] sm:$0xff]
      %v246 = vld [vmem:[%s1 + $0xf8] sm:$0xff]
      %v247 = vld [vmem:[%s2] sm:$0xff]
      %v248 = vld [vmem:[%s2 + $0x8] sm:$0xff]
      %v249 = vld [vmem:[%s2 + $0x10] sm:$0xff]
      %v250 = vld [vmem:[%s2 + $0x18] sm:$0xff]
      %v251 = vld [vmem:[%s2 + $0x20] sm:$0xff]
      %v252 = vld [vmem:[%s2 + $0x28] sm:$0xff]
      %v253 = vld [vmem:[%s2 + $0x30] sm:$0xff]
      %v254 = vld [vmem:[%s2 + $0x38] sm:$0xff]
      %v255 = vld [vmem:[%s2 + $0x40] sm:$0xff]
      %v256 = vld [vmem:[%s2 + $0x48] sm:$0xff]
      %v257 = vld [vmem:[%s2 + $0x50] sm:$0xff]
      %v258 = vld [vmem:[%s2 + $0x58] sm:$0xff]
      %v259 = vld [vmem:[%s2 + $0x60] sm:$0xff]
      %v260 = vld [vmem:[%s2 + $0x68] sm:$0xff]
      %v261 = vld [vmem:[%s2 + $0x70] sm:$0xff]
      %v262 = vld [vmem:[%s2 + $0x78] sm:$0xff]
      %v263 = vld [vmem:[%s2 + $0x80] sm:$0xff]
      %v264 = vld [vmem:[%s2 + $0x88] sm:$0xff]
      %v265 = vld [vmem:[%s2 + $0x90] sm:$0xff]
      %v266 = vld [vmem:[%s2 + $0x98] sm:$0xff]
      %v267 = vld [vmem:[%s2 + $0xa0] sm:$0xff]
      %v268 = vld [vmem:[%s2 + $0xa8] sm:$0xff]
      %v269 = vld [vmem:[%s2 + $0xb0] sm:$0xff]
      %v270 = vld [vmem:[%s2 + $0xb8] sm:$0xff]
      %v271 = vld [vmem:[%s2 + $0xc0] sm:$0xff]
      %v272 = vld [vmem:[%s2 + $0xc8] sm:$0xff]
      %v273 = vld [vmem:[%s2 + $0xd0] sm:$0xff]
      %v274 = vld [vmem:[%s2 + $0xd8] sm:$0xff]
      %v275 = vld [vmem:[%s2 + $0xe0] sm:$0xff]
      %v276 = vld [vmem:[%s2 + $0xe8] sm:$0xff]
      %v277 = vld [vmem:[%s2 + $0xf0] sm:$0xff]
      %v278 = vld [vmem:[%s2 + $0xf8] sm:$0xff]
      %v279 = vld [vmem:[%s3] sm:$0xff]
      %v280 = vld [vmem:[%s3 + $0x8] sm:$0xff]
      %v281 = vld [vmem:[%s3 + $0x10] sm:$0xff]
      %v282 = vld [vmem:[%s3 + $0x18] sm:$0xff]
      %v283 = vld [vmem:[%s3 + $0x20] sm:$0xff]
      %v284 = vld [vmem:[%s3 + $0x28] sm:$0xff]
      %v285 = vld [vmem:[%s3 + $0x30] sm:$0xff]
      %v286 = vld [vmem:[%s3 + $0x38] sm:$0xff]
      %v287 = vld [vmem:[%s3 + $0x40] sm:$0xff]
      %v288 = vld [vmem:[%s3 + $0x48] sm:$0xff]
      %v289 = vld [vmem:[%s3 + $0x50] sm:$0xff]
      %v290 = vld [vmem:[%s3 + $0x58] sm:$0xff]
      %v291 = vld [vmem:[%s3 + $0x60] sm:$0xff]
      %v292 = vld [vmem:[%s3 + $0x68] sm:$0xff]
      %v293 = vld [vmem:[%s3 + $0x70] sm:$0xff]
      %v294 = vld [vmem:[%s3 + $0x78] sm:$0xff]
      %v295 = vld [vmem:[%s3 + $0x80] sm:$0xff]
      %v296 = vld [vmem:[%s3 + $0x88] sm:$0xff]
      %v297 = vld [vmem:[%s3 + $0x90] sm:$0xff]
      %v298 = vld [vmem:[%s3 + $0x98] sm:$0xff]
      %v299 = vld [vmem:[%s3 + $0xa0] sm:$0xff]
      %v300 = vld [vmem:[%s3 + $0xa8] sm:$0xff]
      %v301 = vld [vmem:[%s3 + $0xb0] sm:$0xff]
      %v302 = vld [vmem:[%s3 + $0xb8] sm:$0xff]
      %v303 = vld [vmem:[%s3 + $0xc0] sm:$0xff]
      %v304 = vld [vmem:[%s3 + $0xc8] sm:$0xff]
      %v305 = vld [vmem:[%s3 + $0xd0] sm:$0xff]
      %v306 = vld [vmem:[%s3 + $0xd8] sm:$0xff]
      %v307 = vld [vmem:[%s3 + $0xe0] sm:$0xff]
      %v308 = vld [vmem:[%s3 + $0xe8] sm:$0xff]
      %v309 = vld [vmem:[%s3 + $0xf0] sm:$0xff]
      %v310 = vld [vmem:[%s3 + $0xf8] sm:$0xff]
      %v311 = vld [vmem:[%s192] sm:$0xff]
      %v312 = vld [vmem:[%s192 + $0x8] sm:$0xff]
      %314 = vset.pattern.permute.xlu0 0
      %315 = vperm.xlu0 %314, %v279
      %v316 = vpop.permute.xlu0 %315
      %319 = vset.pattern.permute.xlu0 0
      %320 = vperm.xlu0 %319, %v280
      %v321 = vpop.permute.xlu0 %320
      %324 = vset.pattern.permute.xlu0 0
      %325 = vperm.xlu0 %324, %v281
      %v326 = vpop.permute.xlu0 %325
      %329 = vset.pattern.permute.xlu0 0
      %330 = vperm.xlu0 %329, %v282
      %v331 = vpop.permute.xlu0 %330
      %334 = vset.pattern.permute.xlu0 0
      %335 = vperm.xlu0 %334, %v283
      %v336 = vpop.permute.xlu0 %335
      %339 = vset.pattern.permute.xlu0 0
      %340 = vperm.xlu0 %339, %v284
      %v341 = vpop.permute.xlu0 %340
      %344 = vset.pattern.permute.xlu0 0
      %345 = vperm.xlu0 %344, %v285
      %v346 = vpop.permute.xlu0 %345
      %349 = vset.pattern.permute.xlu0 0
      %350 = vperm.xlu0 %349, %v286
      %v351 = vpop.permute.xlu0 %350
      %354 = vset.pattern.permute.xlu0 0
      %355 = vperm.xlu0 %354, %v287
      %v356 = vpop.permute.xlu0 %355
      %359 = vset.pattern.permute.xlu0 0
      %360 = vperm.xlu0 %359, %v288
      %v361 = vpop.permute.xlu0 %360
      %364 = vset.pattern.permute.xlu0 0
      %365 = vperm.xlu0 %364, %v289
      %v366 = vpop.permute.xlu0 %365
      %369 = vset.pattern.permute.xlu0 0
      %370 = vperm.xlu0 %369, %v290
      %v371 = vpop.permute.xlu0 %370
      %374 = vset.pattern.permute.xlu0 0
      %375 = vperm.xlu0 %374, %v291
      %v376 = vpop.permute.xlu0 %375
      %379 = vset.pattern.permute.xlu0 0
      %380 = vperm.xlu0 %379, %v292
      %v381 = vpop.permute.xlu0 %380
      %384 = vset.pattern.permute.xlu0 0
      %385 = vperm.xlu0 %384, %v293
      %v386 = vpop.permute.xlu0 %385
      %389 = vset.pattern.permute.xlu0 0
      %390 = vperm.xlu0 %389, %v294
      %v391 = vpop.permute.xlu0 %390
      %394 = vset.pattern.permute.xlu0 0
      %395 = vperm.xlu0 %394, %v295
      %v396 = vpop.permute.xlu0 %395
      %399 = vset.pattern.permute.xlu0 0
      %400 = vperm.xlu0 %399, %v296
      %v401 = vpop.permute.xlu0 %400
      %404 = vset.pattern.permute.xlu0 0
      %405 = vperm.xlu0 %404, %v297
      %v406 = vpop.permute.xlu0 %405
      %409 = vset.pattern.permute.xlu0 0
      %410 = vperm.xlu0 %409, %v298
      %v411 = vpop.permute.xlu0 %410
      %414 = vset.pattern.permute.xlu0 0
      %415 = vperm.xlu0 %414, %v299
      %v416 = vpop.permute.xlu0 %415
      %419 = vset.pattern.permute.xlu0 0
      %420 = vperm.xlu0 %419, %v300
      %v421 = vpop.permute.xlu0 %420
      %424 = vset.pattern.permute.xlu0 0
      %425 = vperm.xlu0 %424, %v301
      %v426 = vpop.permute.xlu0 %425
      %429 = vset.pattern.permute.xlu0 0
      %430 = vperm.xlu0 %429, %v302
      %v431 = vpop.permute.xlu0 %430
      %434 = vset.pattern.permute.xlu0 0
      %435 = vperm.xlu0 %434, %v303
      %v436 = vpop.permute.xlu0 %435
      %439 = vset.pattern.permute.xlu0 0
      %440 = vperm.xlu0 %439, %v304
      %v441 = vpop.permute.xlu0 %440
      %444 = vset.pattern.permute.xlu0 0
      %445 = vperm.xlu0 %444, %v305
      %v446 = vpop.permute.xlu0 %445
      %449 = vset.pattern.permute.xlu0 0
      %450 = vperm.xlu0 %449, %v306
      %v451 = vpop.permute.xlu0 %450
      %454 = vset.pattern.permute.xlu0 0
      %455 = vperm.xlu0 %454, %v307
      %v456 = vpop.permute.xlu0 %455
      %459 = vset.pattern.permute.xlu0 0
      %460 = vperm.xlu0 %459, %v308
      %v461 = vpop.permute.xlu0 %460
      %464 = vset.pattern.permute.xlu0 0
      %465 = vperm.xlu0 %464, %v309
      %v466 = vpop.permute.xlu0 %465
      %469 = vset.pattern.permute.xlu0 0
      %470 = vperm.xlu0 %469, %v310
      %v471 = vpop.permute.xlu0 %470
      %v474 = vsel %vm198, %v215, 0
      %v477 = vsel %vm198, %v216, 0
      %v480 = vsel %vm198, %v217, 0
      %v483 = vsel %vm198, %v218, 0
      %v486 = vsel %vm198, %v219, 0
      %v489 = vsel %vm198, %v220, 0
      %v492 = vsel %vm198, %v221, 0
      %v495 = vsel %vm198, %v222, 0
      %v498 = vsel %vm198, %v223, 0
      %v501 = vsel %vm198, %v224, 0
      %v504 = vsel %vm198, %v225, 0
      %v507 = vsel %vm198, %v226, 0
      %v510 = vsel %vm198, %v227, 0
      %v513 = vsel %vm198, %v228, 0
      %v516 = vsel %vm198, %v229, 0
      %v519 = vsel %vm198, %v230, 0
      %v522 = vsel %vm198, %v231, 0
      %v525 = vsel %vm198, %v232, 0
      %v528 = vsel %vm198, %v233, 0
      %v531 = vsel %vm198, %v234, 0
      %v534 = vsel %vm198, %v235, 0
      %v537 = vsel %vm198, %v236, 0
      %v540 = vsel %vm198, %v237, 0
      %v543 = vsel %vm198, %v238, 0
      %v546 = vsel %vm198, %v239, 0
      %v549 = vsel %vm198, %v240, 0
      %v552 = vsel %vm198, %v241, 0
      %v555 = vsel %vm198, %v242, 0
      %v558 = vsel %vm198, %v243, 0
      %v561 = vsel %vm198, %v244, 0
      %v564 = vsel %vm198, %v245, 0
      %v567 = vsel %vm198, %v246, 0
      %569 = vmatprep.subr.mxu0 0.0
      %570 = vmatpush1.msra.mxu0 0.0
      %571 = vmatprep.subr.mxu0 0.0
      %572 = vmatpush1.msra.mxu0 0.0
      %573 = vmatprep.subr.mxu0 0.0
      %574 = vmatpush1.msra.mxu0 0.0
      %575 = vmatprep.subr.mxu0 0.0
      %576 = vmatpush1.msra.mxu0 0.0
      %577 = vmatprep.subr.mxu0 0.0
      %578 = vmatpush1.msra.mxu0 0.0
      %579 = vmatprep.subr.mxu0 0.0
      %580 = vmatpush1.msra.mxu0 0.0
      %581 = vmatprep.subr.mxu0 0.0
      %582 = vmatpush1.msra.mxu0 0.0
      %583 = vmatprep.subr.mxu0 0.0
      %584 = vmatpush1.msra.mxu0 0.0
      %585 = vmatprep.subr.mxu0 0.0
      %586 = vmatpush1.msra.mxu0 0.0
      %587 = vmatprep.subr.mxu0 0.0
      %588 = vmatpush1.msra.mxu0 0.0
      %589 = vmatprep.subr.mxu0 0.0
      %590 = vmatpush1.msra.mxu0 0.0
      %591 = vmatprep.subr.mxu0 0.0
      %592 = vmatpush1.msra.mxu0 0.0
      %593 = vmatprep.subr.mxu0 0.0
      %594 = vmatpush1.msra.mxu0 0.0
      %595 = vmatprep.subr.mxu0 0.0
      %596 = vmatpush1.msra.mxu0 0.0
      %597 = vmatprep.subr.mxu0 0.0
      %598 = vmatpush1.msra.mxu0 %v312
      %599 = vmatprep.subr.mxu0 0.0
      %600 = vmatpush1.msra.mxu0 %v311
      %601 = vmatprep.subr.mxu0 0.0
      %602 = vmatpush2.msra.mxu0 0.0
      %603 = vmatprep.subr.mxu0 0.0
      %604 = vmatpush2.msra.mxu0 0.0
      %605 = vmatprep.subr.mxu0 0.0
      %606 = vmatpush2.msra.mxu0 0.0
      %607 = vmatprep.subr.mxu0 0.0
      %608 = vmatpush2.msra.mxu0 0.0
      %609 = vmatprep.subr.mxu0 0.0
      %610 = vmatpush2.msra.mxu0 0.0
      %611 = vmatprep.subr.mxu0 0.0
      %612 = vmatpush2.msra.mxu0 0.0
      %613 = vmatprep.subr.mxu0 0.0
      %614 = vmatpush2.msra.mxu0 0.0
      %615 = vmatprep.subr.mxu0 0.0
      %616 = vmatpush2.msra.mxu0 0.0
      %617 = vmatprep.subr.mxu0 0.0
      %618 = vmatpush2.msra.mxu0 0.0
      %619 = vmatprep.subr.mxu0 0.0
      %620 = vmatpush2.msra.mxu0 0.0
      %621 = vmatprep.subr.mxu0 0.0
      %622 = vmatpush2.msra.mxu0 0.0
      %623 = vmatprep.subr.mxu0 0.0
      %624 = vmatpush2.msra.mxu0 0.0
      %625 = vmatprep.subr.mxu0 0.0
      %626 = vmatpush2.msra.mxu0 0.0
      %627 = vmatprep.subr.mxu0 0.0
      %628 = vmatpush2.msra.mxu0 0.0
      %629 = vmatprep.subr.mxu0 0.0
      %630 = vmatpush2.msra.mxu0 0.0
      %631 = vmatprep.subr.mxu0 0.0
      %632 = vmatpush2.msra.mxu0 0.0
      %633 = vmatprep.mubr.f32.mxu0 0.0
      %634 = vmatmul.mubr.f32.gmra.mxu0 %v474
      %v635 = vpop.f32.mrf.mxu0
      %v636 = vadd.f32 %v316, %v635
      %v637 = vpop.f32.mrf.mxu0
      %638 = vmatprep.mubr.f32.mxu0 0.0
      %639 = vmatmul.mubr.f32.gmra.mxu0 %v477
      %v640 = vpop.f32.mrf.mxu0
      %v641 = vadd.f32 %v321, %v640
      %v642 = vpop.f32.mrf.mxu0
      %643 = vmatprep.mubr.f32.mxu0 0.0
      %644 = vmatmul.mubr.f32.gmra.mxu0 %v480
      %v645 = vpop.f32.mrf.mxu0
      %v646 = vadd.f32 %v326, %v645
      %v647 = vpop.f32.mrf.mxu0
      %648 = vmatprep.mubr.f32.mxu0 0.0
      %649 = vmatmul.mubr.f32.gmra.mxu0 %v483
      %v650 = vpop.f32.mrf.mxu0
      %v651 = vadd.f32 %v331, %v650
      %v652 = vpop.f32.mrf.mxu0
      %653 = vmatprep.mubr.f32.mxu0 0.0
      %654 = vmatmul.mubr.f32.gmra.mxu0 %v486
      %v655 = vpop.f32.mrf.mxu0
      %v656 = vadd.f32 %v336, %v655
      %v657 = vpop.f32.mrf.mxu0
      %658 = vmatprep.mubr.f32.mxu0 0.0
      %659 = vmatmul.mubr.f32.gmra.mxu0 %v489
      %v660 = vpop.f32.mrf.mxu0
      %v661 = vadd.f32 %v341, %v660
      %v662 = vpop.f32.mrf.mxu0
      %663 = vmatprep.mubr.f32.mxu0 0.0
      %664 = vmatmul.mubr.f32.gmra.mxu0 %v492
      %v665 = vpop.f32.mrf.mxu0
      %v666 = vadd.f32 %v346, %v665
      %v667 = vpop.f32.mrf.mxu0
      %668 = vmatprep.mubr.f32.mxu0 0.0
      %669 = vmatmul.mubr.f32.gmra.mxu0 %v495
      %v670 = vpop.f32.mrf.mxu0
      %v671 = vadd.f32 %v351, %v670
      %v672 = vpop.f32.mrf.mxu0
      %673 = vmatprep.mubr.f32.mxu0 0.0
      %674 = vmatmul.mubr.f32.gmra.mxu0 %v498
      %v675 = vpop.f32.mrf.mxu0
      %v676 = vadd.f32 %v356, %v675
      %v677 = vpop.f32.mrf.mxu0
      %678 = vmatprep.mubr.f32.mxu0 0.0
      %679 = vmatmul.mubr.f32.gmra.mxu0 %v501
      %v680 = vpop.f32.mrf.mxu0
      %v681 = vadd.f32 %v361, %v680
      %v682 = vpop.f32.mrf.mxu0
      %683 = vmatprep.mubr.f32.mxu0 0.0
      %684 = vmatmul.mubr.f32.gmra.mxu0 %v504
      %v685 = vpop.f32.mrf.mxu0
      %v686 = vadd.f32 %v366, %v685
      %v687 = vpop.f32.mrf.mxu0
      %688 = vmatprep.mubr.f32.mxu0 0.0
      %689 = vmatmul.mubr.f32.gmra.mxu0 %v507
      %v690 = vpop.f32.mrf.mxu0
      %v691 = vadd.f32 %v371, %v690
      %v692 = vpop.f32.mrf.mxu0
      %693 = vmatprep.mubr.f32.mxu0 0.0
      %694 = vmatmul.mubr.f32.gmra.mxu0 %v510
      %v695 = vpop.f32.mrf.mxu0
      %v696 = vadd.f32 %v376, %v695
      %v697 = vpop.f32.mrf.mxu0
      %698 = vmatprep.mubr.f32.mxu0 0.0
      %699 = vmatmul.mubr.f32.gmra.mxu0 %v513
      %v700 = vpop.f32.mrf.mxu0
      %v701 = vadd.f32 %v381, %v700
      %v702 = vpop.f32.mrf.mxu0
      %703 = vmatprep.mubr.f32.mxu0 0.0
      %704 = vmatmul.mubr.f32.gmra.mxu0 %v516
      %v705 = vpop.f32.mrf.mxu0
      %v706 = vadd.f32 %v386, %v705
      %v707 = vpop.f32.mrf.mxu0
      %708 = vmatprep.mubr.f32.mxu0 0.0
      %709 = vmatmul.mubr.f32.gmra.mxu0 %v519
      %v710 = vpop.f32.mrf.mxu0
      %v711 = vadd.f32 %v391, %v710
      %v712 = vpop.f32.mrf.mxu0
      %713 = vmatprep.mubr.f32.mxu0 0.0
      %714 = vmatmul.mubr.f32.gmra.mxu0 %v522
      %v715 = vpop.f32.mrf.mxu0
      %v716 = vadd.f32 %v396, %v715
      %v717 = vpop.f32.mrf.mxu0
      %718 = vmatprep.mubr.f32.mxu0 0.0
      %719 = vmatmul.mubr.f32.gmra.mxu0 %v525
      %v720 = vpop.f32.mrf.mxu0
      %v721 = vadd.f32 %v401, %v720
      %v722 = vpop.f32.mrf.mxu0
      %723 = vmatprep.mubr.f32.mxu0 0.0
      %724 = vmatmul.mubr.f32.gmra.mxu0 %v528
      %v725 = vpop.f32.mrf.mxu0
      %v726 = vadd.f32 %v406, %v725
      %v727 = vpop.f32.mrf.mxu0
      %728 = vmatprep.mubr.f32.mxu0 0.0
      %729 = vmatmul.mubr.f32.gmra.mxu0 %v531
      %v730 = vpop.f32.mrf.mxu0
      %v731 = vadd.f32 %v411, %v730
      %v732 = vpop.f32.mrf.mxu0
      %733 = vmatprep.mubr.f32.mxu0 0.0
      %734 = vmatmul.mubr.f32.gmra.mxu0 %v534
      %v735 = vpop.f32.mrf.mxu0
      %v736 = vadd.f32 %v416, %v735
      %v737 = vpop.f32.mrf.mxu0
      %738 = vmatprep.mubr.f32.mxu0 0.0
      %739 = vmatmul.mubr.f32.gmra.mxu0 %v537
      %v740 = vpop.f32.mrf.mxu0
      %v741 = vadd.f32 %v421, %v740
      %v742 = vpop.f32.mrf.mxu0
      %743 = vmatprep.mubr.f32.mxu0 0.0
      %744 = vmatmul.mubr.f32.gmra.mxu0 %v540
      %v745 = vpop.f32.mrf.mxu0
      %v746 = vadd.f32 %v426, %v745
      %v747 = vpop.f32.mrf.mxu0
      %748 = vmatprep.mubr.f32.mxu0 0.0
      %749 = vmatmul.mubr.f32.gmra.mxu0 %v543
      %v750 = vpop.f32.mrf.mxu0
      %v751 = vadd.f32 %v431, %v750
      %v752 = vpop.f32.mrf.mxu0
      %753 = vmatprep.mubr.f32.mxu0 0.0
      %754 = vmatmul.mubr.f32.gmra.mxu0 %v546
      %v755 = vpop.f32.mrf.mxu0
      %v756 = vadd.f32 %v436, %v755
      %v757 = vpop.f32.mrf.mxu0
      %758 = vmatprep.mubr.f32.mxu0 0.0
      %759 = vmatmul.mubr.f32.gmra.mxu0 %v549
      %v760 = vpop.f32.mrf.mxu0
      %v761 = vadd.f32 %v441, %v760
      %v762 = vpop.f32.mrf.mxu0
      %763 = vmatprep.mubr.f32.mxu0 0.0
      %764 = vmatmul.mubr.f32.gmra.mxu0 %v552
      %v765 = vpop.f32.mrf.mxu0
      %v766 = vadd.f32 %v446, %v765
      %v767 = vpop.f32.mrf.mxu0
      %768 = vmatprep.mubr.f32.mxu0 0.0
      %769 = vmatmul.mubr.f32.gmra.mxu0 %v555
      %v770 = vpop.f32.mrf.mxu0
      %v771 = vadd.f32 %v451, %v770
      %v772 = vpop.f32.mrf.mxu0
      %773 = vmatprep.mubr.f32.mxu0 0.0
      %774 = vmatmul.mubr.f32.gmra.mxu0 %v558
      %v775 = vpop.f32.mrf.mxu0
      %v776 = vadd.f32 %v456, %v775
      %v777 = vpop.f32.mrf.mxu0
      %778 = vmatprep.mubr.f32.mxu0 0.0
      %779 = vmatmul.mubr.f32.gmra.mxu0 %v561
      %v780 = vpop.f32.mrf.mxu0
      %v781 = vadd.f32 %v461, %v780
      %v782 = vpop.f32.mrf.mxu0
      %783 = vmatprep.mubr.f32.mxu0 0.0
      %784 = vmatmul.mubr.f32.gmra.mxu0 %v564
      %v785 = vpop.f32.mrf.mxu0
      %v786 = vadd.f32 %v466, %v785
      %v787 = vpop.f32.mrf.mxu0
      %788 = vmatprep.mubr.f32.mxu0 0.0
      %789 = vmatmul.mubr.f32.gmra.mxu0 %v567
      %v790 = vpop.f32.mrf.mxu0
      %v791 = vadd.f32 %v471, %v790
      %v792 = vpop.f32.mrf.mxu0
      %793 = vdwg.mxu0
      %794 = vst.msk [vmem:[#allocation2] sm:$0xff] %vm198, %v636
      %795 = vst.msk [vmem:[#allocation2 + $0x8] sm:$0xff] %vm198, %v641
      %796 = vst.msk [vmem:[#allocation2 + $0x10] sm:$0xff] %vm198, %v646
      %797 = vst.msk [vmem:[#allocation2 + $0x18] sm:$0xff] %vm198, %v651
      %798 = vst.msk [vmem:[#allocation2 + $0x20] sm:$0xff] %vm198, %v656
      %799 = vst.msk [vmem:[#allocation2 + $0x28] sm:$0xff] %vm198, %v661
      %800 = vst.msk [vmem:[#allocation2 + $0x30] sm:$0xff] %vm198, %v666
      %801 = vst.msk [vmem:[#allocation2 + $0x38] sm:$0xff] %vm198, %v671
      %802 = vst.msk [vmem:[#allocation2 + $0x40] sm:$0xff] %vm198, %v676
      %803 = vst.msk [vmem:[#allocation2 + $0x48] sm:$0xff] %vm198, %v681
      %804 = vst.msk [vmem:[#allocation2 + $0x50] sm:$0xff] %vm198, %v686
      %805 = vst.msk [vmem:[#allocation2 + $0x58] sm:$0xff] %vm198, %v691
      %806 = vst.msk [vmem:[#allocation2 + $0x60] sm:$0xff] %vm198, %v696
      %807 = vst.msk [vmem:[#allocation2 + $0x68] sm:$0xff] %vm198, %v701
      %808 = vst.msk [vmem:[#allocation2 + $0x70] sm:$0xff] %vm198, %v706
      %809 = vst.msk [vmem:[#allocation2 + $0x78] sm:$0xff] %vm198, %v711
      %810 = vst.msk [vmem:[#allocation2 + $0x80] sm:$0xff] %vm198, %v716
      %811 = vst.msk [vmem:[#allocation2 + $0x88] sm:$0xff] %vm198, %v721
      %812 = vst.msk [vmem:[#allocation2 + $0x90] sm:$0xff] %vm198, %v726
      %813 = vst.msk [vmem:[#allocation2 + $0x98] sm:$0xff] %vm198, %v731
      %814 = vst.msk [vmem:[#allocation2 + $0xa0] sm:$0xff] %vm198, %v736
      %815 = vst.msk [vmem:[#allocation2 + $0xa8] sm:$0xff] %vm198, %v741
      %816 = vst.msk [vmem:[#allocation2 + $0xb0] sm:$0xff] %vm198, %v746
      %817 = vst.msk [vmem:[#allocation2 + $0xb8] sm:$0xff] %vm198, %v751
      %818 = vst.msk [vmem:[#allocation2 + $0xc0] sm:$0xff] %vm198, %v756
      %819 = vst.msk [vmem:[#allocation2 + $0xc8] sm:$0xff] %vm198, %v761
      %820 = vst.msk [vmem:[#allocation2 + $0xd0] sm:$0xff] %vm198, %v766
      %821 = vst.msk [vmem:[#allocation2 + $0xd8] sm:$0xff] %vm198, %v771
      %822 = vst.msk [vmem:[#allocation2 + $0xe0] sm:$0xff] %vm198, %v776
      %823 = vst.msk [vmem:[#allocation2 + $0xe8] sm:$0xff] %vm198, %v781
      %824 = vst.msk [vmem:[#allocation2 + $0xf0] sm:$0xff] %vm198, %v786
      %825 = vst.msk [vmem:[#allocation2 + $0xf8] sm:$0xff] %vm198, %v791
      %s826 = scalar_lea.vmem %s192, 16
      %v827 = vld [vmem:[%s826] sm:$0xff]
      %v828 = vld [vmem:[%s826 + $0x8] sm:$0xff]
      %829 = vmatprep.subr.mxu0 0.0
      %830 = vmatpush1.msra.mxu0 0.0
      %831 = vmatprep.subr.mxu0 0.0
      %832 = vmatpush1.msra.mxu0 0.0
      %833 = vmatprep.subr.mxu0 0.0
      %834 = vmatpush1.msra.mxu0 0.0
      %835 = vmatprep.subr.mxu0 0.0
      %836 = vmatpush1.msra.mxu0 0.0
      %837 = vmatprep.subr.mxu0 0.0
      %838 = vmatpush1.msra.mxu0 0.0
      %839 = vmatprep.subr.mxu0 0.0
      %840 = vmatpush1.msra.mxu0 0.0
      %841 = vmatprep.subr.mxu0 0.0
      %842 = vmatpush1.msra.mxu0 0.0
      %843 = vmatprep.subr.mxu0 0.0
      %844 = vmatpush1.msra.mxu0 0.0
      %845 = vmatprep.subr.mxu0 0.0
      %846 = vmatpush1.msra.mxu0 0.0
      %847 = vmatprep.subr.mxu0 0.0
      %848 = vmatpush1.msra.mxu0 0.0
      %849 = vmatprep.subr.mxu0 0.0
      %850 = vmatpush1.msra.mxu0 0.0
      %851 = vmatprep.subr.mxu0 0.0
      %852 = vmatpush1.msra.mxu0 0.0
      %853 = vmatprep.subr.mxu0 0.0
      %854 = vmatpush1.msra.mxu0 0.0
      %855 = vmatprep.subr.mxu0 0.0
      %856 = vmatpush1.msra.mxu0 0.0
      %857 = vmatprep.subr.mxu0 0.0
      %858 = vmatpush1.msra.mxu0 %v828
      %859 = vmatprep.subr.mxu0 0.0
      %860 = vmatpush1.msra.mxu0 %v827
      %861 = vmatprep.subr.mxu0 0.0
      %862 = vmatpush2.msra.mxu0 0.0
      %863 = vmatprep.subr.mxu0 0.0
      %864 = vmatpush2.msra.mxu0 0.0
      %865 = vmatprep.subr.mxu0 0.0
      %866 = vmatpush2.msra.mxu0 0.0
      %867 = vmatprep.subr.mxu0 0.0
      %868 = vmatpush2.msra.mxu0 0.0
      %869 = vmatprep.subr.mxu0 0.0
      %870 = vmatpush2.msra.mxu0 0.0
      %871 = vmatprep.subr.mxu0 0.0
      %872 = vmatpush2.msra.mxu0 0.0
      %873 = vmatprep.subr.mxu0 0.0
      %874 = vmatpush2.msra.mxu0 0.0
      %875 = vmatprep.subr.mxu0 0.0
      %876 = vmatpush2.msra.mxu0 0.0
      %877 = vmatprep.subr.mxu0 0.0
      %878 = vmatpush2.msra.mxu0 0.0
      %879 = vmatprep.subr.mxu0 0.0
      %880 = vmatpush2.msra.mxu0 0.0
      %881 = vmatprep.subr.mxu0 0.0
      %882 = vmatpush2.msra.mxu0 0.0
      %883 = vmatprep.subr.mxu0 0.0
      %884 = vmatpush2.msra.mxu0 0.0
      %885 = vmatprep.subr.mxu0 0.0
      %886 = vmatpush2.msra.mxu0 0.0
      %887 = vmatprep.subr.mxu0 0.0
      %888 = vmatpush2.msra.mxu0 0.0
      %889 = vmatprep.subr.mxu0 0.0
      %890 = vmatpush2.msra.mxu0 0.0
      %891 = vmatprep.subr.mxu0 0.0
      %892 = vmatpush2.msra.mxu0 0.0
      %893 = vmatprep.mubr.f32.mxu0 0.0
      %894 = vmatmul.mubr.f32.gmra.mxu0 %v474
      %v895 = vpop.f32.mrf.mxu0
      %v896 = vadd.f32 %v316, %v895
      %v897 = vpop.f32.mrf.mxu0
      %898 = vmatprep.mubr.f32.mxu0 0.0
      %899 = vmatmul.mubr.f32.gmra.mxu0 %v477
      %v900 = vpop.f32.mrf.mxu0
      %v901 = vadd.f32 %v321, %v900
      %v902 = vpop.f32.mrf.mxu0
      %903 = vmatprep.mubr.f32.mxu0 0.0
      %904 = vmatmul.mubr.f32.gmra.mxu0 %v480
      %v905 = vpop.f32.mrf.mxu0
      %v906 = vadd.f32 %v326, %v905
      %v907 = vpop.f32.mrf.mxu0
      %908 = vmatprep.mubr.f32.mxu0 0.0
      %909 = vmatmul.mubr.f32.gmra.mxu0 %v483
      %v910 = vpop.f32.mrf.mxu0
      %v911 = vadd.f32 %v331, %v910
      %v912 = vpop.f32.mrf.mxu0
      %913 = vmatprep.mubr.f32.mxu0 0.0
      %914 = vmatmul.mubr.f32.gmra.mxu0 %v486
      %v915 = vpop.f32.mrf.mxu0
      %v916 = vadd.f32 %v336, %v915
      %v917 = vpop.f32.mrf.mxu0
      %918 = vmatprep.mubr.f32.mxu0 0.0
      %919 = vmatmul.mubr.f32.gmra.mxu0 %v489
      %v920 = vpop.f32.mrf.mxu0
      %v921 = vadd.f32 %v341, %v920
      %v922 = vpop.f32.mrf.mxu0
      %923 = vmatprep.mubr.f32.mxu0 0.0
      %924 = vmatmul.mubr.f32.gmra.mxu0 %v492
      %v925 = vpop.f32.mrf.mxu0
      %v926 = vadd.f32 %v346, %v925
      %v927 = vpop.f32.mrf.mxu0
      %928 = vmatprep.mubr.f32.mxu0 0.0
      %929 = vmatmul.mubr.f32.gmra.mxu0 %v495
      %v930 = vpop.f32.mrf.mxu0
      %v931 = vadd.f32 %v351, %v930
      %v932 = vpop.f32.mrf.mxu0
      %933 = vmatprep.mubr.f32.mxu0 0.0
      %934 = vmatmul.mubr.f32.gmra.mxu0 %v498
      %v935 = vpop.f32.mrf.mxu0
      %v936 = vadd.f32 %v356, %v935
      %v937 = vpop.f32.mrf.mxu0
      %938 = vmatprep.mubr.f32.mxu0 0.0
      %939 = vmatmul.mubr.f32.gmra.mxu0 %v501
      %v940 = vpop.f32.mrf.mxu0
      %v941 = vadd.f32 %v361, %v940
      %v942 = vpop.f32.mrf.mxu0
      %943 = vmatprep.mubr.f32.mxu0 0.0
      %944 = vmatmul.mubr.f32.gmra.mxu0 %v504
      %v945 = vpop.f32.mrf.mxu0
      %v946 = vadd.f32 %v366, %v945
      %v947 = vpop.f32.mrf.mxu0
      %948 = vmatprep.mubr.f32.mxu0 0.0
      %949 = vmatmul.mubr.f32.gmra.mxu0 %v507
      %v950 = vpop.f32.mrf.mxu0
      %v951 = vadd.f32 %v371, %v950
      %v952 = vpop.f32.mrf.mxu0
      %953 = vmatprep.mubr.f32.mxu0 0.0
      %954 = vmatmul.mubr.f32.gmra.mxu0 %v510
      %v955 = vpop.f32.mrf.mxu0
      %v956 = vadd.f32 %v376, %v955
      %v957 = vpop.f32.mrf.mxu0
      %958 = vmatprep.mubr.f32.mxu0 0.0
      %959 = vmatmul.mubr.f32.gmra.mxu0 %v513
      %v960 = vpop.f32.mrf.mxu0
      %v961 = vadd.f32 %v381, %v960
      %v962 = vpop.f32.mrf.mxu0
      %963 = vmatprep.mubr.f32.mxu0 0.0
      %964 = vmatmul.mubr.f32.gmra.mxu0 %v516
      %v965 = vpop.f32.mrf.mxu0
      %v966 = vadd.f32 %v386, %v965
      %v967 = vpop.f32.mrf.mxu0
      %968 = vmatprep.mubr.f32.mxu0 0.0
      %969 = vmatmul.mubr.f32.gmra.mxu0 %v519
      %v970 = vpop.f32.mrf.mxu0
      %v971 = vadd.f32 %v391, %v970
      %v972 = vpop.f32.mrf.mxu0
      %973 = vmatprep.mubr.f32.mxu0 0.0
      %974 = vmatmul.mubr.f32.gmra.mxu0 %v522
      %v975 = vpop.f32.mrf.mxu0
      %v976 = vadd.f32 %v396, %v975
      %v977 = vpop.f32.mrf.mxu0
      %978 = vmatprep.mubr.f32.mxu0 0.0
      %979 = vmatmul.mubr.f32.gmra.mxu0 %v525
      %v980 = vpop.f32.mrf.mxu0
      %v981 = vadd.f32 %v401, %v980
      %v982 = vpop.f32.mrf.mxu0
      %983 = vmatprep.mubr.f32.mxu0 0.0
      %984 = vmatmul.mubr.f32.gmra.mxu0 %v528
      %v985 = vpop.f32.mrf.mxu0
      %v986 = vadd.f32 %v406, %v985
      %v987 = vpop.f32.mrf.mxu0
      %988 = vmatprep.mubr.f32.mxu0 0.0
      %989 = vmatmul.mubr.f32.gmra.mxu0 %v531
      %v990 = vpop.f32.mrf.mxu0
      %v991 = vadd.f32 %v411, %v990
      %v992 = vpop.f32.mrf.mxu0
      %993 = vmatprep.mubr.f32.mxu0 0.0
      %994 = vmatmul.mubr.f32.gmra.mxu0 %v534
      %v995 = vpop.f32.mrf.mxu0
      %v996 = vadd.f32 %v416, %v995
      %v997 = vpop.f32.mrf.mxu0
      %998 = vmatprep.mubr.f32.mxu0 0.0
      %999 = vmatmul.mubr.f32.gmra.mxu0 %v537
      %v1000 = vpop.f32.mrf.mxu0
      %v1001 = vadd.f32 %v421, %v1000
      %v1002 = vpop.f32.mrf.mxu0
      %1003 = vmatprep.mubr.f32.mxu0 0.0
      %1004 = vmatmul.mubr.f32.gmra.mxu0 %v540
      %v1005 = vpop.f32.mrf.mxu0
      %v1006 = vadd.f32 %v426, %v1005
      %v1007 = vpop.f32.mrf.mxu0
      %1008 = vmatprep.mubr.f32.mxu0 0.0
      %1009 = vmatmul.mubr.f32.gmra.mxu0 %v543
      %v1010 = vpop.f32.mrf.mxu0
      %v1011 = vadd.f32 %v431, %v1010
      %v1012 = vpop.f32.mrf.mxu0
      %1013 = vmatprep.mubr.f32.mxu0 0.0
      %1014 = vmatmul.mubr.f32.gmra.mxu0 %v546
      %v1015 = vpop.f32.mrf.mxu0
      %v1016 = vadd.f32 %v436, %v1015
      %v1017 = vpop.f32.mrf.mxu0
      %1018 = vmatprep.mubr.f32.mxu0 0.0
      %1019 = vmatmul.mubr.f32.gmra.mxu0 %v549
      %v1020 = vpop.f32.mrf.mxu0
      %v1021 = vadd.f32 %v441, %v1020
      %v1022 = vpop.f32.mrf.mxu0
      %1023 = vmatprep.mubr.f32.mxu0 0.0
      %1024 = vmatmul.mubr.f32.gmra.mxu0 %v552
      %v1025 = vpop.f32.mrf.mxu0
      %v1026 = vadd.f32 %v446, %v1025
      %v1027 = vpop.f32.mrf.mxu0
      %1028 = vmatprep.mubr.f32.mxu0 0.0
      %1029 = vmatmul.mubr.f32.gmra.mxu0 %v555
      %v1030 = vpop.f32.mrf.mxu0
      %v1031 = vadd.f32 %v451, %v1030
      %v1032 = vpop.f32.mrf.mxu0
      %1033 = vmatprep.mubr.f32.mxu0 0.0
      %1034 = vmatmul.mubr.f32.gmra.mxu0 %v558
      %v1035 = vpop.f32.mrf.mxu0
      %v1036 = vadd.f32 %v456, %v1035
      %v1037 = vpop.f32.mrf.mxu0
      %1038 = vmatprep.mubr.f32.mxu0 0.0
      %1039 = vmatmul.mubr.f32.gmra.mxu0 %v561
      %v1040 = vpop.f32.mrf.mxu0
      %v1041 = vadd.f32 %v461, %v1040
      %v1042 = vpop.f32.mrf.mxu0
      %1043 = vmatprep.mubr.f32.mxu0 0.0
      %1044 = vmatmul.mubr.f32.gmra.mxu0 %v564
      %v1045 = vpop.f32.mrf.mxu0
      %v1046 = vadd.f32 %v466, %v1045
      %v1047 = vpop.f32.mrf.mxu0
      %1048 = vmatprep.mubr.f32.mxu0 0.0
      %1049 = vmatmul.mubr.f32.gmra.mxu0 %v567
      %v1050 = vpop.f32.mrf.mxu0
      %v1051 = vadd.f32 %v471, %v1050
      %v1052 = vpop.f32.mrf.mxu0
      %1053 = vdwg.mxu0
      %s1054 = scalar_lea.vmem [#allocation2], 256
      %1055 = vst.msk [vmem:[%s1054] sm:$0xff] %vm198, %v896
      %1056 = vst.msk [vmem:[%s1054 + $0x8] sm:$0xff] %vm198, %v901
      %1057 = vst.msk [vmem:[%s1054 + $0x10] sm:$0xff] %vm198, %v906
      %1058 = vst.msk [vmem:[%s1054 + $0x18] sm:$0xff] %vm198, %v911
      %1059 = vst.msk [vmem:[%s1054 + $0x20] sm:$0xff] %vm198, %v916
      %1060 = vst.msk [vmem:[%s1054 + $0x28] sm:$0xff] %vm198, %v921
      %1061 = vst.msk [vmem:[%s1054 + $0x30] sm:$0xff] %vm198, %v926
      %1062 = vst.msk [vmem:[%s1054 + $0x38] sm:$0xff] %vm198, %v931
      %1063 = vst.msk [vmem:[%s1054 + $0x40] sm:$0xff] %vm198, %v936
      %1064 = vst.msk [vmem:[%s1054 + $0x48] sm:$0xff] %vm198, %v941
      %1065 = vst.msk [vmem:[%s1054 + $0x50] sm:$0xff] %vm198, %v946
      %1066 = vst.msk [vmem:[%s1054 + $0x58] sm:$0xff] %vm198, %v951
      %1067 = vst.msk [vmem:[%s1054 + $0x60] sm:$0xff] %vm198, %v956
      %1068 = vst.msk [vmem:[%s1054 + $0x68] sm:$0xff] %vm198, %v961
      %1069 = vst.msk [vmem:[%s1054 + $0x70] sm:$0xff] %vm198, %v966
      %1070 = vst.msk [vmem:[%s1054 + $0x78] sm:$0xff] %vm198, %v971
      %1071 = vst.msk [vmem:[%s1054 + $0x80] sm:$0xff] %vm198, %v976
      %1072 = vst.msk [vmem:[%s1054 + $0x88] sm:$0xff] %vm198, %v981
      %1073 = vst.msk [vmem:[%s1054 + $0x90] sm:$0xff] %vm198, %v986
      %1074 = vst.msk [vmem:[%s1054 + $0x98] sm:$0xff] %vm198, %v991
      %1075 = vst.msk [vmem:[%s1054 + $0xa0] sm:$0xff] %vm198, %v996
      %1076 = vst.msk [vmem:[%s1054 + $0xa8] sm:$0xff] %vm198, %v1001
      %1077 = vst.msk [vmem:[%s1054 + $0xb0] sm:$0xff] %vm198, %v1006
      %1078 = vst.msk [vmem:[%s1054 + $0xb8] sm:$0xff] %vm198, %v1011
      %1079 = vst.msk [vmem:[%s1054 + $0xc0] sm:$0xff] %vm198, %v1016
      %1080 = vst.msk [vmem:[%s1054 + $0xc8] sm:$0xff] %vm198, %v1021
      %1081 = vst.msk [vmem:[%s1054 + $0xd0] sm:$0xff] %vm198, %v1026
      %1082 = vst.msk [vmem:[%s1054 + $0xd8] sm:$0xff] %vm198, %v1031
      %1083 = vst.msk [vmem:[%s1054 + $0xe0] sm:$0xff] %vm198, %v1036
      %1084 = vst.msk [vmem:[%s1054 + $0xe8] sm:$0xff] %vm198, %v1041
      %1085 = vst.msk [vmem:[%s1054 + $0xf0] sm:$0xff] %vm198, %v1046
      %1086 = vst.msk [vmem:[%s1054 + $0xf8] sm:$0xff] %vm198, %v1051
      %v1087 = vld [vmem:[#allocation2] sm:$0xff]
      %v1088 = vld [vmem:[#allocation2 + $0x8] sm:$0xff]
      %v1089 = vld [vmem:[#allocation2 + $0x10] sm:$0xff]
      %v1090 = vld [vmem:[#allocation2 + $0x18] sm:$0xff]
      %v1091 = vld [vmem:[#allocation2 + $0x20] sm:$0xff]
      %v1092 = vld [vmem:[#allocation2 + $0x28] sm:$0xff]
      %v1093 = vld [vmem:[#allocation2 + $0x30] sm:$0xff]
      %v1094 = vld [vmem:[#allocation2 + $0x38] sm:$0xff]
      %v1095 = vld [vmem:[#allocation2 + $0x40] sm:$0xff]
      %v1096 = vld [vmem:[#allocation2 + $0x48] sm:$0xff]
      %v1097 = vld [vmem:[#allocation2 + $0x50] sm:$0xff]
      %v1098 = vld [vmem:[#allocation2 + $0x58] sm:$0xff]
      %v1099 = vld [vmem:[#allocation2 + $0x60] sm:$0xff]
      %v1100 = vld [vmem:[#allocation2 + $0x68] sm:$0xff]
      %v1101 = vld [vmem:[#allocation2 + $0x70] sm:$0xff]
      %v1102 = vld [vmem:[#allocation2 + $0x78] sm:$0xff]
      %v1103 = vld [vmem:[#allocation2 + $0x80] sm:$0xff]
      %v1104 = vld [vmem:[#allocation2 + $0x88] sm:$0xff]
      %v1105 = vld [vmem:[#allocation2 + $0x90] sm:$0xff]
      %v1106 = vld [vmem:[#allocation2 + $0x98] sm:$0xff]
      %v1107 = vld [vmem:[#allocation2 + $0xa0] sm:$0xff]
      %v1108 = vld [vmem:[#allocation2 + $0xa8] sm:$0xff]
      %v1109 = vld [vmem:[#allocation2 + $0xb0] sm:$0xff]
      %v1110 = vld [vmem:[#allocation2 + $0xb8] sm:$0xff]
      %v1111 = vld [vmem:[#allocation2 + $0xc0] sm:$0xff]
      %v1112 = vld [vmem:[#allocation2 + $0xc8] sm:$0xff]
      %v1113 = vld [vmem:[#allocation2 + $0xd0] sm:$0xff]
      %v1114 = vld [vmem:[#allocation2 + $0xd8] sm:$0xff]
      %v1115 = vld [vmem:[#allocation2 + $0xe0] sm:$0xff]
      %v1116 = vld [vmem:[#allocation2 + $0xe8] sm:$0xff]
      %v1117 = vld [vmem:[#allocation2 + $0xf0] sm:$0xff]
      %v1118 = vld [vmem:[#allocation2 + $0xf8] sm:$0xff]
      %v1119 = vld [vmem:[#allocation3] sm:$0xff]
      %v1120 = vld [vmem:[#allocation3 + $0x8] sm:$0xff]
      %v1121 = vld [vmem:[#allocation3 + $0x10] sm:$0xff]
      %v1122 = vld [vmem:[#allocation3 + $0x18] sm:$0xff]
      %v1123 = vld [vmem:[#allocation3 + $0x20] sm:$0xff]
      %v1124 = vld [vmem:[#allocation3 + $0x28] sm:$0xff]
      %v1125 = vld [vmem:[#allocation3 + $0x30] sm:$0xff]
      %v1126 = vld [vmem:[#allocation3 + $0x38] sm:$0xff]
      %vm1127 = vcmask 523264
      %v1129 = vsel %vm1127, %v247, 0
      %v1132 = vsel %vm1127, %v248, 0
      %v1135 = vsel %vm1127, %v249, 0
      %v1138 = vsel %vm1127, %v250, 0
      %v1141 = vsel %vm1127, %v251, 0
      %v1144 = vsel %vm1127, %v252, 0
      %v1147 = vsel %vm1127, %v253, 0
      %v1150 = vsel %vm1127, %v254, 0
      %v1153 = vsel %vm1127, %v255, 0
      %v1156 = vsel %vm1127, %v256, 0
      %v1159 = vsel %vm1127, %v257, 0
      %v1162 = vsel %vm1127, %v258, 0
      %v1165 = vsel %vm1127, %v259, 0
      %v1168 = vsel %vm1127, %v260, 0
      %v1171 = vsel %vm1127, %v261, 0
      %v1174 = vsel %vm1127, %v262, 0
      %v1177 = vsel %vm1127, %v263, 0
      %v1180 = vsel %vm1127, %v264, 0
      %v1183 = vsel %vm1127, %v265, 0
      %v1186 = vsel %vm1127, %v266, 0
      %v1189 = vsel %vm1127, %v267, 0
      %v1192 = vsel %vm1127, %v268, 0
      %v1195 = vsel %vm1127, %v269, 0
      %v1198 = vsel %vm1127, %v270, 0
      %v1201 = vsel %vm1127, %v271, 0
      %v1204 = vsel %vm1127, %v272, 0
      %v1207 = vsel %vm1127, %v273, 0
      %v1210 = vsel %vm1127, %v274, 0
      %v1213 = vsel %vm1127, %v275, 0
      %v1216 = vsel %vm1127, %v276, 0
      %v1219 = vsel %vm1127, %v277, 0
      %v1222 = vsel %vm1127, %v278, 0
      %1224 = vmatprep.subr.mxu0 0.0
      %1225 = vmatpush1.msra.mxu0 0.0
      %1226 = vmatprep.subr.mxu0 0.0
      %1227 = vmatpush1.msra.mxu0 0.0
      %1228 = vmatprep.subr.mxu0 0.0
      %1229 = vmatpush1.msra.mxu0 0.0
      %1230 = vmatprep.subr.mxu0 0.0
      %1231 = vmatpush1.msra.mxu0 0.0
      %1232 = vmatprep.subr.mxu0 0.0
      %1233 = vmatpush1.msra.mxu0 0.0
      %1234 = vmatprep.subr.mxu0 0.0
      %1235 = vmatpush1.msra.mxu0 0.0
      %1236 = vmatprep.subr.mxu0 0.0
      %1237 = vmatpush1.msra.mxu0 0.0
      %1238 = vmatprep.subr.mxu0 0.0
      %1239 = vmatpush1.msra.mxu0 0.0
      %1240 = vmatprep.subr.mxu0 0.0
      %1241 = vmatpush1.msra.mxu0 %v1126
      %1242 = vmatprep.subr.mxu0 0.0
      %1243 = vmatpush1.msra.mxu0 %v1125
      %1244 = vmatprep.subr.mxu0 0.0
      %1245 = vmatpush1.msra.mxu0 %v1124
      %1246 = vmatprep.subr.mxu0 0.0
      %1247 = vmatpush1.msra.mxu0 %v1123
      %1248 = vmatprep.subr.mxu0 0.0
      %1249 = vmatpush1.msra.mxu0 %v1122
      %1250 = vmatprep.subr.mxu0 0.0
      %1251 = vmatpush1.msra.mxu0 %v1121
      %1252 = vmatprep.subr.mxu0 0.0
      %1253 = vmatpush1.msra.mxu0 %v1120
      %1254 = vmatprep.subr.mxu0 0.0
      %1255 = vmatpush1.msra.mxu0 %v1119
      %1256 = vmatprep.subr.mxu0 0.0
      %1257 = vmatpush2.msra.mxu0 0.0
      %1258 = vmatprep.subr.mxu0 0.0
      %1259 = vmatpush2.msra.mxu0 0.0
      %1260 = vmatprep.subr.mxu0 0.0
      %1261 = vmatpush2.msra.mxu0 0.0
      %1262 = vmatprep.subr.mxu0 0.0
      %1263 = vmatpush2.msra.mxu0 0.0
      %1264 = vmatprep.subr.mxu0 0.0
      %1265 = vmatpush2.msra.mxu0 0.0
      %1266 = vmatprep.subr.mxu0 0.0
      %1267 = vmatpush2.msra.mxu0 0.0
      %1268 = vmatprep.subr.mxu0 0.0
      %1269 = vmatpush2.msra.mxu0 0.0
      %1270 = vmatprep.subr.mxu0 0.0
      %1271 = vmatpush2.msra.mxu0 0.0
      %1272 = vmatprep.subr.mxu0 0.0
      %1273 = vmatpush2.msra.mxu0 0.0
      %1274 = vmatprep.subr.mxu0 0.0
      %1275 = vmatpush2.msra.mxu0 0.0
      %1276 = vmatprep.subr.mxu0 0.0
      %1277 = vmatpush2.msra.mxu0 0.0
      %1278 = vmatprep.subr.mxu0 0.0
      %1279 = vmatpush2.msra.mxu0 0.0
      %1280 = vmatprep.subr.mxu0 0.0
      %1281 = vmatpush2.msra.mxu0 0.0
      %1282 = vmatprep.subr.mxu0 0.0
      %1283 = vmatpush2.msra.mxu0 0.0
      %1284 = vmatprep.subr.mxu0 0.0
      %1285 = vmatpush2.msra.mxu0 0.0
      %1286 = vmatprep.subr.mxu0 0.0
      %1287 = vmatpush2.msra.mxu0 0.0
      %1288 = vmatprep.mubr.f32.mxu0 0.0
      %1289 = vmatmul.mubr.f32.gmra.mxu0 %v1129
      %v1290 = vpop.f32.mrf.mxu0
      %v1291 = vadd.f32 0.0, %v1290
      %v1292 = vpop.f32.mrf.mxu0
      %1293 = vmatprep.mubr.f32.mxu0 0.0
      %1294 = vmatmul.mubr.f32.gmra.mxu0 %v1132
      %v1295 = vpop.f32.mrf.mxu0
      %v1296 = vadd.f32 0.0, %v1295
      %v1297 = vpop.f32.mrf.mxu0
      %1298 = vmatprep.mubr.f32.mxu0 0.0
      %1299 = vmatmul.mubr.f32.gmra.mxu0 %v1135
      %v1300 = vpop.f32.mrf.mxu0
      %v1301 = vadd.f32 0.0, %v1300
      %v1302 = vpop.f32.mrf.mxu0
      %1303 = vmatprep.mubr.f32.mxu0 0.0
      %1304 = vmatmul.mubr.f32.gmra.mxu0 %v1138
      %v1305 = vpop.f32.mrf.mxu0
      %v1306 = vadd.f32 0.0, %v1305
      %v1307 = vpop.f32.mrf.mxu0
      %1308 = vmatprep.mubr.f32.mxu0 0.0
      %1309 = vmatmul.mubr.f32.gmra.mxu0 %v1141
      %v1310 = vpop.f32.mrf.mxu0
      %v1311 = vadd.f32 0.0, %v1310
      %v1312 = vpop.f32.mrf.mxu0
      %1313 = vmatprep.mubr.f32.mxu0 0.0
      %1314 = vmatmul.mubr.f32.gmra.mxu0 %v1144
      %v1315 = vpop.f32.mrf.mxu0
      %v1316 = vadd.f32 0.0, %v1315
      %v1317 = vpop.f32.mrf.mxu0
      %1318 = vmatprep.mubr.f32.mxu0 0.0
      %1319 = vmatmul.mubr.f32.gmra.mxu0 %v1147
      %v1320 = vpop.f32.mrf.mxu0
      %v1321 = vadd.f32 0.0, %v1320
      %v1322 = vpop.f32.mrf.mxu0
      %1323 = vmatprep.mubr.f32.mxu0 0.0
      %1324 = vmatmul.mubr.f32.gmra.mxu0 %v1150
      %v1325 = vpop.f32.mrf.mxu0
      %v1326 = vadd.f32 0.0, %v1325
      %v1327 = vpop.f32.mrf.mxu0
      %1328 = vmatprep.mubr.f32.mxu0 0.0
      %1329 = vmatmul.mubr.f32.gmra.mxu0 %v1153
      %v1330 = vpop.f32.mrf.mxu0
      %v1331 = vadd.f32 0.0, %v1330
      %v1332 = vpop.f32.mrf.mxu0
      %1333 = vmatprep.mubr.f32.mxu0 0.0
      %1334 = vmatmul.mubr.f32.gmra.mxu0 %v1156
      %v1335 = vpop.f32.mrf.mxu0
      %v1336 = vadd.f32 0.0, %v1335
      %v1337 = vpop.f32.mrf.mxu0
      %1338 = vmatprep.mubr.f32.mxu0 0.0
      %1339 = vmatmul.mubr.f32.gmra.mxu0 %v1159
      %v1340 = vpop.f32.mrf.mxu0
      %v1341 = vadd.f32 0.0, %v1340
      %v1342 = vpop.f32.mrf.mxu0
      %1343 = vmatprep.mubr.f32.mxu0 0.0
      %1344 = vmatmul.mubr.f32.gmra.mxu0 %v1162
      %v1345 = vpop.f32.mrf.mxu0
      %v1346 = vadd.f32 0.0, %v1345
      %v1347 = vpop.f32.mrf.mxu0
      %1348 = vmatprep.mubr.f32.mxu0 0.0
      %1349 = vmatmul.mubr.f32.gmra.mxu0 %v1165
      %v1350 = vpop.f32.mrf.mxu0
      %v1351 = vadd.f32 0.0, %v1350
      %v1352 = vpop.f32.mrf.mxu0
      %1353 = vmatprep.mubr.f32.mxu0 0.0
      %1354 = vmatmul.mubr.f32.gmra.mxu0 %v1168
      %v1355 = vpop.f32.mrf.mxu0
      %v1356 = vadd.f32 0.0, %v1355
      %v1357 = vpop.f32.mrf.mxu0
      %1358 = vmatprep.mubr.f32.mxu0 0.0
      %1359 = vmatmul.mubr.f32.gmra.mxu0 %v1171
      %v1360 = vpop.f32.mrf.mxu0
      %v1361 = vadd.f32 0.0, %v1360
      %v1362 = vpop.f32.mrf.mxu0
      %1363 = vmatprep.mubr.f32.mxu0 0.0
      %1364 = vmatmul.mubr.f32.gmra.mxu0 %v1174
      %v1365 = vpop.f32.mrf.mxu0
      %v1366 = vadd.f32 0.0, %v1365
      %v1367 = vpop.f32.mrf.mxu0
      %1368 = vmatprep.mubr.f32.mxu0 0.0
      %1369 = vmatmul.mubr.f32.gmra.mxu0 %v1177
      %v1370 = vpop.f32.mrf.mxu0
      %v1371 = vadd.f32 0.0, %v1370
      %v1372 = vpop.f32.mrf.mxu0
      %1373 = vmatprep.mubr.f32.mxu0 0.0
      %1374 = vmatmul.mubr.f32.gmra.mxu0 %v1180
      %v1375 = vpop.f32.mrf.mxu0
      %v1376 = vadd.f32 0.0, %v1375
      %v1377 = vpop.f32.mrf.mxu0
      %1378 = vmatprep.mubr.f32.mxu0 0.0
      %1379 = vmatmul.mubr.f32.gmra.mxu0 %v1183
      %v1380 = vpop.f32.mrf.mxu0
      %v1381 = vadd.f32 0.0, %v1380
      %v1382 = vpop.f32.mrf.mxu0
      %1383 = vmatprep.mubr.f32.mxu0 0.0
      %1384 = vmatmul.mubr.f32.gmra.mxu0 %v1186
      %v1385 = vpop.f32.mrf.mxu0
      %v1386 = vadd.f32 0.0, %v1385
      %v1387 = vpop.f32.mrf.mxu0
      %1388 = vmatprep.mubr.f32.mxu0 0.0
      %1389 = vmatmul.mubr.f32.gmra.mxu0 %v1189
      %v1390 = vpop.f32.mrf.mxu0
      %v1391 = vadd.f32 0.0, %v1390
      %v1392 = vpop.f32.mrf.mxu0
      %1393 = vmatprep.mubr.f32.mxu0 0.0
      %1394 = vmatmul.mubr.f32.gmra.mxu0 %v1192
      %v1395 = vpop.f32.mrf.mxu0
      %v1396 = vadd.f32 0.0, %v1395
      %v1397 = vpop.f32.mrf.mxu0
      %1398 = vmatprep.mubr.f32.mxu0 0.0
      %1399 = vmatmul.mubr.f32.gmra.mxu0 %v1195
      %v1400 = vpop.f32.mrf.mxu0
      %v1401 = vadd.f32 0.0, %v1400
      %v1402 = vpop.f32.mrf.mxu0
      %1403 = vmatprep.mubr.f32.mxu0 0.0
      %1404 = vmatmul.mubr.f32.gmra.mxu0 %v1198
      %v1405 = vpop.f32.mrf.mxu0
      %v1406 = vadd.f32 0.0, %v1405
      %v1407 = vpop.f32.mrf.mxu0
      %1408 = vmatprep.mubr.f32.mxu0 0.0
      %1409 = vmatmul.mubr.f32.gmra.mxu0 %v1201
      %v1410 = vpop.f32.mrf.mxu0
      %v1411 = vadd.f32 0.0, %v1410
      %v1412 = vpop.f32.mrf.mxu0
      %1413 = vmatprep.mubr.f32.mxu0 0.0
      %1414 = vmatmul.mubr.f32.gmra.mxu0 %v1204
      %v1415 = vpop.f32.mrf.mxu0
      %v1416 = vadd.f32 0.0, %v1415
      %v1417 = vpop.f32.mrf.mxu0
      %1418 = vmatprep.mubr.f32.mxu0 0.0
      %1419 = vmatmul.mubr.f32.gmra.mxu0 %v1207
      %v1420 = vpop.f32.mrf.mxu0
      %v1421 = vadd.f32 0.0, %v1420
      %v1422 = vpop.f32.mrf.mxu0
      %1423 = vmatprep.mubr.f32.mxu0 0.0
      %1424 = vmatmul.mubr.f32.gmra.mxu0 %v1210
      %v1425 = vpop.f32.mrf.mxu0
      %v1426 = vadd.f32 0.0, %v1425
      %v1427 = vpop.f32.mrf.mxu0
      %1428 = vmatprep.mubr.f32.mxu0 0.0
      %1429 = vmatmul.mubr.f32.gmra.mxu0 %v1213
      %v1430 = vpop.f32.mrf.mxu0
      %v1431 = vadd.f32 0.0, %v1430
      %v1432 = vpop.f32.mrf.mxu0
      %1433 = vmatprep.mubr.f32.mxu0 0.0
      %1434 = vmatmul.mubr.f32.gmra.mxu0 %v1216
      %v1435 = vpop.f32.mrf.mxu0
      %v1436 = vadd.f32 0.0, %v1435
      %v1437 = vpop.f32.mrf.mxu0
      %1438 = vmatprep.mubr.f32.mxu0 0.0
      %1439 = vmatmul.mubr.f32.gmra.mxu0 %v1219
      %v1440 = vpop.f32.mrf.mxu0
      %v1441 = vadd.f32 0.0, %v1440
      %v1442 = vpop.f32.mrf.mxu0
      %1443 = vmatprep.mubr.f32.mxu0 0.0
      %1444 = vmatmul.mubr.f32.gmra.mxu0 %v1222
      %v1445 = vpop.f32.mrf.mxu0
      %v1446 = vadd.f32 0.0, %v1445
      %v1447 = vpop.f32.mrf.mxu0
      %1448 = vdwg.mxu0
      %v1449 = vadd.f32 %v1087, %v1291
      %v1450 = vadd.f32 %v1088, %v1296
      %v1451 = vadd.f32 %v1089, %v1301
      %v1452 = vadd.f32 %v1090, %v1306
      %v1453 = vadd.f32 %v1091, %v1311
      %v1454 = vadd.f32 %v1092, %v1316
      %v1455 = vadd.f32 %v1093, %v1321
      %v1456 = vadd.f32 %v1094, %v1326
      %v1457 = vadd.f32 %v1095, %v1331
      %v1458 = vadd.f32 %v1096, %v1336
      %v1459 = vadd.f32 %v1097, %v1341
      %v1460 = vadd.f32 %v1098, %v1346
      %v1461 = vadd.f32 %v1099, %v1351
      %v1462 = vadd.f32 %v1100, %v1356
      %v1463 = vadd.f32 %v1101, %v1361
      %v1464 = vadd.f32 %v1102, %v1366
      %v1465 = vadd.f32 %v1103, %v1371
      %v1466 = vadd.f32 %v1104, %v1376
      %v1467 = vadd.f32 %v1105, %v1381
      %v1468 = vadd.f32 %v1106, %v1386
      %v1469 = vadd.f32 %v1107, %v1391
      %v1470 = vadd.f32 %v1108, %v1396
      %v1471 = vadd.f32 %v1109, %v1401
      %v1472 = vadd.f32 %v1110, %v1406
      %v1473 = vadd.f32 %v1111, %v1411
      %v1474 = vadd.f32 %v1112, %v1416
      %v1475 = vadd.f32 %v1113, %v1421
      %v1476 = vadd.f32 %v1114, %v1426
      %v1477 = vadd.f32 %v1115, %v1431
      %v1478 = vadd.f32 %v1116, %v1436
      %v1479 = vadd.f32 %v1117, %v1441
      %v1480 = vadd.f32 %v1118, %v1446
      %v1481 = vmul.f32 %v1449, 0.5
      %v1482 = vmul.f32 %v1450, 0.5
      %v1483 = vmul.f32 %v1451, 0.5
      %v1484 = vmul.f32 %v1452, 0.5
      %v1485 = vmul.f32 %v1453, 0.5
      %v1486 = vmul.f32 %v1454, 0.5
      %v1487 = vmul.f32 %v1455, 0.5
      %v1488 = vmul.f32 %v1456, 0.5
      %v1489 = vtanh.pop %v1481
      %v1490 = vtanh.pop %v1482
      %v1491 = vtanh.pop %v1483
      %v1492 = vtanh.pop %v1484
      %v1493 = vtanh.pop %v1485
      %v1494 = vtanh.pop %v1486
      %v1495 = vtanh.pop %v1487
      %v1496 = vtanh.pop %v1488
      %v1497 = vmul.f32 %v1489, 0.5
      %v1498 = vmul.f32 %v1490, 0.5
      %v1499 = vmul.f32 %v1491, 0.5
      %v1500 = vmul.f32 %v1492, 0.5
      %v1501 = vmul.f32 %v1493, 0.5
      %v1502 = vmul.f32 %v1494, 0.5
      %v1503 = vmul.f32 %v1495, 0.5
      %v1504 = vmul.f32 %v1496, 0.5
      %v1505 = vadd.f32 %v1497, 0.5
      %v1506 = vadd.f32 %v1498, 0.5
      %v1507 = vadd.f32 %v1499, 0.5
      %v1508 = vadd.f32 %v1500, 0.5
      %v1509 = vadd.f32 %v1501, 0.5
      %v1510 = vadd.f32 %v1502, 0.5
      %v1511 = vadd.f32 %v1503, 0.5
      %v1512 = vadd.f32 %v1504, 0.5
      %v1513 = vmul.f32 %v1457, 0.5
      %v1514 = vmul.f32 %v1458, 0.5
      %v1515 = vmul.f32 %v1459, 0.5
      %v1516 = vmul.f32 %v1460, 0.5
      %v1517 = vmul.f32 %v1461, 0.5
      %v1518 = vmul.f32 %v1462, 0.5
      %v1519 = vmul.f32 %v1463, 0.5
      %v1520 = vmul.f32 %v1464, 0.5
      %v1521 = vtanh.pop %v1513
      %v1522 = vtanh.pop %v1514
      %v1523 = vtanh.pop %v1515
      %v1524 = vtanh.pop %v1516
      %v1525 = vtanh.pop %v1517
      %v1526 = vtanh.pop %v1518
      %v1527 = vtanh.pop %v1519
      %v1528 = vtanh.pop %v1520
      %v1529 = vmul.f32 %v1521, 0.5
      %v1530 = vmul.f32 %v1522, 0.5
      %v1531 = vmul.f32 %v1523, 0.5
      %v1532 = vmul.f32 %v1524, 0.5
      %v1533 = vmul.f32 %v1525, 0.5
      %v1534 = vmul.f32 %v1526, 0.5
      %v1535 = vmul.f32 %v1527, 0.5
      %v1536 = vmul.f32 %v1528, 0.5
      %v1537 = vadd.f32 %v1529, 0.5
      %v1538 = vadd.f32 %v1530, 0.5
      %v1539 = vadd.f32 %v1531, 0.5
      %v1540 = vadd.f32 %v1532, 0.5
      %v1541 = vadd.f32 %v1533, 0.5
      %v1542 = vadd.f32 %v1534, 0.5
      %v1543 = vadd.f32 %v1535, 0.5
      %v1544 = vadd.f32 %v1536, 0.5
      %v1545 = vtanh.pop %v1465
      %v1546 = vtanh.pop %v1466
      %v1547 = vtanh.pop %v1467
      %v1548 = vtanh.pop %v1468
      %v1549 = vtanh.pop %v1469
      %v1550 = vtanh.pop %v1470
      %v1551 = vtanh.pop %v1471
      %v1552 = vtanh.pop %v1472
      %v1553 = vmul.f32 %v1473, 0.5
      %v1554 = vmul.f32 %v1474, 0.5
      %v1555 = vmul.f32 %v1475, 0.5
      %v1556 = vmul.f32 %v1476, 0.5
      %v1557 = vmul.f32 %v1477, 0.5
      %v1558 = vmul.f32 %v1478, 0.5
      %v1559 = vmul.f32 %v1479, 0.5
      %v1560 = vmul.f32 %v1480, 0.5
      %v1561 = vtanh.pop %v1553
      %v1562 = vtanh.pop %v1554
      %v1563 = vtanh.pop %v1555
      %v1564 = vtanh.pop %v1556
      %v1565 = vtanh.pop %v1557
      %v1566 = vtanh.pop %v1558
      %v1567 = vtanh.pop %v1559
      %v1568 = vtanh.pop %v1560
      %v1569 = vmul.f32 %v1561, 0.5
      %v1570 = vmul.f32 %v1562, 0.5
      %v1571 = vmul.f32 %v1563, 0.5
      %v1572 = vmul.f32 %v1564, 0.5
      %v1573 = vmul.f32 %v1565, 0.5
      %v1574 = vmul.f32 %v1566, 0.5
      %v1575 = vmul.f32 %v1567, 0.5
      %v1576 = vmul.f32 %v1568, 0.5
      %v1577 = vadd.f32 %v1569, 0.5
      %v1578 = vadd.f32 %v1570, 0.5
      %v1579 = vadd.f32 %v1571, 0.5
      %v1580 = vadd.f32 %v1572, 0.5
      %v1581 = vadd.f32 %v1573, 0.5
      %v1582 = vadd.f32 %v1574, 0.5
      %v1583 = vadd.f32 %v1575, 0.5
      %v1584 = vadd.f32 %v1576, 0.5
      %v1585 = vld [vmem:[#allocation4] sm:$0xff]
      %v1586 = vld [vmem:[#allocation4 + $0x8] sm:$0xff]
      %v1587 = vld [vmem:[#allocation4 + $0x10] sm:$0xff]
      %v1588 = vld [vmem:[#allocation4 + $0x18] sm:$0xff]
      %v1589 = vld [vmem:[#allocation4 + $0x20] sm:$0xff]
      %v1590 = vld [vmem:[#allocation4 + $0x28] sm:$0xff]
      %v1591 = vld [vmem:[#allocation4 + $0x30] sm:$0xff]
      %v1592 = vld [vmem:[#allocation4 + $0x38] sm:$0xff]
      %v1593 = vmul.f32 %v1537, %v1585
      %v1594 = vmul.f32 %v1538, %v1586
      %v1595 = vmul.f32 %v1539, %v1587
      %v1596 = vmul.f32 %v1540, %v1588
      %v1597 = vmul.f32 %v1541, %v1589
      %v1598 = vmul.f32 %v1542, %v1590
      %v1599 = vmul.f32 %v1543, %v1591
      %v1600 = vmul.f32 %v1544, %v1592
      %v1601 = vmul.f32 %v1505, %v1545
      %v1602 = vmul.f32 %v1506, %v1546
      %v1603 = vmul.f32 %v1507, %v1547
      %v1604 = vmul.f32 %v1508, %v1548
      %v1605 = vmul.f32 %v1509, %v1549
      %v1606 = vmul.f32 %v1510, %v1550
      %v1607 = vmul.f32 %v1511, %v1551
      %v1608 = vmul.f32 %v1512, %v1552
      %v1609 = vadd.f32 %v1593, %v1601
      %v1610 = vadd.f32 %v1594, %v1602
      %v1611 = vadd.f32 %v1595, %v1603
      %v1612 = vadd.f32 %v1596, %v1604
      %v1613 = vadd.f32 %v1597, %v1605
      %v1614 = vadd.f32 %v1598, %v1606
      %v1615 = vadd.f32 %v1599, %v1607
      %v1616 = vadd.f32 %v1600, %v1608
      %v1617 = vtanh.pop %v1609
      %v1618 = vtanh.pop %v1610
      %v1619 = vtanh.pop %v1611
      %v1620 = vtanh.pop %v1612
      %v1621 = vtanh.pop %v1613
      %v1622 = vtanh.pop %v1614
      %v1623 = vtanh.pop %v1615
      %v1624 = vtanh.pop %v1616
      %v1625 = vmul.f32 %v1577, %v1617
      %v1626 = vmul.f32 %v1578, %v1618
      %v1627 = vmul.f32 %v1579, %v1619
      %v1628 = vmul.f32 %v1580, %v1620
      %v1629 = vmul.f32 %v1581, %v1621
      %v1630 = vmul.f32 %v1582, %v1622
      %v1631 = vmul.f32 %v1583, %v1623
      %v1632 = vmul.f32 %v1584, %v1624
      %1633 = vst.msk [vmem:[#allocation4] sm:$0xff] %vm198, %v1609
      %1634 = vst.msk [vmem:[#allocation4 + $0x8] sm:$0xff] %vm198, %v1610
      %1635 = vst.msk [vmem:[#allocation4 + $0x10] sm:$0xff] %vm198, %v1611
      %1636 = vst.msk [vmem:[#allocation4 + $0x18] sm:$0xff] %vm198, %v1612
      %1637 = vst.msk [vmem:[#allocation4 + $0x20] sm:$0xff] %vm198, %v1613
      %1638 = vst.msk [vmem:[#allocation4 + $0x28] sm:$0xff] %vm198, %v1614
      %1639 = vst.msk [vmem:[#allocation4 + $0x30] sm:$0xff] %vm198, %v1615
      %1640 = vst.msk [vmem:[#allocation4 + $0x38] sm:$0xff] %vm198, %v1616
      %1641 = vst.msk [vmem:[#allocation3] sm:$0xff] %vm198, %v1625
      %1642 = vst.msk [vmem:[#allocation3 + $0x8] sm:$0xff] %vm198, %v1626
      %1643 = vst.msk [vmem:[#allocation3 + $0x10] sm:$0xff] %vm198, %v1627
      %1644 = vst.msk [vmem:[#allocation3 + $0x18] sm:$0xff] %vm198, %v1628
      %1645 = vst.msk [vmem:[#allocation3 + $0x20] sm:$0xff] %vm198, %v1629
      %1646 = vst.msk [vmem:[#allocation3 + $0x28] sm:$0xff] %vm198, %v1630
      %1647 = vst.msk [vmem:[#allocation3 + $0x30] sm:$0xff] %vm198, %v1631
      %1648 = vst.msk [vmem:[#allocation3 + $0x38] sm:$0xff] %vm198, %v1632
      %1653 = vrot.lane.b32.xlu0 %v1625, 114
      %v1654 = vpop.permute.xlu0 %1653
      %1655 = vrot.lane.b32.xlu0 %v1626, 114
      %v1656 = vpop.permute.xlu0 %1655
      %1657 = vrot.lane.b32.xlu0 %v1627, 114
      %v1658 = vpop.permute.xlu0 %1657
      %1659 = vrot.lane.b32.xlu0 %v1628, 114
      %v1660 = vpop.permute.xlu0 %1659
      %vm1665 = vcmask 15360
      %1666 = vst.msk [vmem:[%s197] sm:$0xff] %vm1665, %v1654
      %1667 = vst.msk [vmem:[%s197 + $0x8] sm:$0xff] %vm1665, %v1656
      %1668 = vst.msk [vmem:[%s197 + $0x10] sm:$0xff] %vm1665, %v1658
      %1669 = vst.msk [vmem:[%s197 + $0x18] sm:$0xff] %vm1665, %v1660
      %1670 = vst.msk [vmem:[%s197 + $0x20] sm:$0xff] %vm1665, %v1629
      %1671 = vst.msk [vmem:[%s197 + $0x28] sm:$0xff] %vm1665, %v1630
      %1672 = vst.msk [vmem:[%s197 + $0x30] sm:$0xff] %vm1665, %v1631
      %1673 = vst.msk [vmem:[%s197 + $0x38] sm:$0xff] %vm1665, %v1632
      %v1674 = vld [vmem:[%s1054] sm:$0xff]
      %v1675 = vld [vmem:[%s1054 + $0x8] sm:$0xff]
      %v1676 = vld [vmem:[%s1054 + $0x10] sm:$0xff]
      %v1677 = vld [vmem:[%s1054 + $0x18] sm:$0xff]
      %v1678 = vld [vmem:[%s1054 + $0x20] sm:$0xff]
      %v1679 = vld [vmem:[%s1054 + $0x28] sm:$0xff]
      %v1680 = vld [vmem:[%s1054 + $0x30] sm:$0xff]
      %v1681 = vld [vmem:[%s1054 + $0x38] sm:$0xff]
      %v1682 = vld [vmem:[%s1054 + $0x40] sm:$0xff]
      %v1683 = vld [vmem:[%s1054 + $0x48] sm:$0xff]
      %v1684 = vld [vmem:[%s1054 + $0x50] sm:$0xff]
      %v1685 = vld [vmem:[%s1054 + $0x58] sm:$0xff]
      %v1686 = vld [vmem:[%s1054 + $0x60] sm:$0xff]
      %v1687 = vld [vmem:[%s1054 + $0x68] sm:$0xff]
      %v1688 = vld [vmem:[%s1054 + $0x70] sm:$0xff]
      %v1689 = vld [vmem:[%s1054 + $0x78] sm:$0xff]
      %v1690 = vld [vmem:[%s1054 + $0x80] sm:$0xff]
      %v1691 = vld [vmem:[%s1054 + $0x88] sm:$0xff]
      %v1692 = vld [vmem:[%s1054 + $0x90] sm:$0xff]
      %v1693 = vld [vmem:[%s1054 + $0x98] sm:$0xff]
      %v1694 = vld [vmem:[%s1054 + $0xa0] sm:$0xff]
      %v1695 = vld [vmem:[%s1054 + $0xa8] sm:$0xff]
      %v1696 = vld [vmem:[%s1054 + $0xb0] sm:$0xff]
      %v1697 = vld [vmem:[%s1054 + $0xb8] sm:$0xff]
      %v1698 = vld [vmem:[%s1054 + $0xc0] sm:$0xff]
      %v1699 = vld [vmem:[%s1054 + $0xc8] sm:$0xff]
      %v1700 = vld [vmem:[%s1054 + $0xd0] sm:$0xff]
      %v1701 = vld [vmem:[%s1054 + $0xd8] sm:$0xff]
      %v1702 = vld [vmem:[%s1054 + $0xe0] sm:$0xff]
      %v1703 = vld [vmem:[%s1054 + $0xe8] sm:$0xff]
      %v1704 = vld [vmem:[%s1054 + $0xf0] sm:$0xff]
      %v1705 = vld [vmem:[%s1054 + $0xf8] sm:$0xff]
      %v1706 = vld [vmem:[#allocation3] sm:$0xff]
      %v1707 = vld [vmem:[#allocation3 + $0x8] sm:$0xff]
      %v1708 = vld [vmem:[#allocation3 + $0x10] sm:$0xff]
      %v1709 = vld [vmem:[#allocation3 + $0x18] sm:$0xff]
      %v1710 = vld [vmem:[#allocation3 + $0x20] sm:$0xff]
      %v1711 = vld [vmem:[#allocation3 + $0x28] sm:$0xff]
      %v1712 = vld [vmem:[#allocation3 + $0x30] sm:$0xff]
      %v1713 = vld [vmem:[#allocation3 + $0x38] sm:$0xff]
      %1714 = vmatprep.subr.mxu0 0.0
      %1715 = vmatpush1.msra.mxu0 0.0
      %1716 = vmatprep.subr.mxu0 0.0
      %1717 = vmatpush1.msra.mxu0 0.0
      %1718 = vmatprep.subr.mxu0 0.0
      %1719 = vmatpush1.msra.mxu0 0.0
      %1720 = vmatprep.subr.mxu0 0.0
      %1721 = vmatpush1.msra.mxu0 0.0
      %1722 = vmatprep.subr.mxu0 0.0
      %1723 = vmatpush1.msra.mxu0 0.0
      %1724 = vmatprep.subr.mxu0 0.0
      %1725 = vmatpush1.msra.mxu0 0.0
      %1726 = vmatprep.subr.mxu0 0.0
      %1727 = vmatpush1.msra.mxu0 0.0
      %1728 = vmatprep.subr.mxu0 0.0
      %1729 = vmatpush1.msra.mxu0 0.0
      %1730 = vmatprep.subr.mxu0 0.0
      %1731 = vmatpush1.msra.mxu0 %v1713
      %1732 = vmatprep.subr.mxu0 0.0
      %1733 = vmatpush1.msra.mxu0 %v1712
      %1734 = vmatprep.subr.mxu0 0.0
      %1735 = vmatpush1.msra.mxu0 %v1711
      %1736 = vmatprep.subr.mxu0 0.0
      %1737 = vmatpush1.msra.mxu0 %v1710
      %1738 = vmatprep.subr.mxu0 0.0
      %1739 = vmatpush1.msra.mxu0 %v1709
      %1740 = vmatprep.subr.mxu0 0.0
      %1741 = vmatpush1.msra.mxu0 %v1708
      %1742 = vmatprep.subr.mxu0 0.0
      %1743 = vmatpush1.msra.mxu0 %v1707
      %1744 = vmatprep.subr.mxu0 0.0
      %1745 = vmatpush1.msra.mxu0 %v1706
      %1746 = vmatprep.subr.mxu0 0.0
      %1747 = vmatpush2.msra.mxu0 0.0
      %1748 = vmatprep.subr.mxu0 0.0
      %1749 = vmatpush2.msra.mxu0 0.0
      %1750 = vmatprep.subr.mxu0 0.0
      %1751 = vmatpush2.msra.mxu0 0.0
      %1752 = vmatprep.subr.mxu0 0.0
      %1753 = vmatpush2.msra.mxu0 0.0
      %1754 = vmatprep.subr.mxu0 0.0
      %1755 = vmatpush2.msra.mxu0 0.0
      %1756 = vmatprep.subr.mxu0 0.0
      %1757 = vmatpush2.msra.mxu0 0.0
      %1758 = vmatprep.subr.mxu0 0.0
      %1759 = vmatpush2.msra.mxu0 0.0
      %1760 = vmatprep.subr.mxu0 0.0
      %1761 = vmatpush2.msra.mxu0 0.0
      %1762 = vmatprep.subr.mxu0 0.0
      %1763 = vmatpush2.msra.mxu0 0.0
      %1764 = vmatprep.subr.mxu0 0.0
      %1765 = vmatpush2.msra.mxu0 0.0
      %1766 = vmatprep.subr.mxu0 0.0
      %1767 = vmatpush2.msra.mxu0 0.0
      %1768 = vmatprep.subr.mxu0 0.0
      %1769 = vmatpush2.msra.mxu0 0.0
      %1770 = vmatprep.subr.mxu0 0.0
      %1771 = vmatpush2.msra.mxu0 0.0
      %1772 = vmatprep.subr.mxu0 0.0
      %1773 = vmatpush2.msra.mxu0 0.0
      %1774 = vmatprep.subr.mxu0 0.0
      %1775 = vmatpush2.msra.mxu0 0.0
      %1776 = vmatprep.subr.mxu0 0.0
      %1777 = vmatpush2.msra.mxu0 0.0
      %1778 = vmatprep.mubr.f32.mxu0 0.0
      %1779 = vmatmul.mubr.f32.gmra.mxu0 %v1129
      %v1780 = vpop.f32.mrf.mxu0
      %v1781 = vadd.f32 0.0, %v1780
      %v1782 = vpop.f32.mrf.mxu0
      %1783 = vmatprep.mubr.f32.mxu0 0.0
      %1784 = vmatmul.mubr.f32.gmra.mxu0 %v1132
      %v1785 = vpop.f32.mrf.mxu0
      %v1786 = vadd.f32 0.0, %v1785
      %v1787 = vpop.f32.mrf.mxu0
      %1788 = vmatprep.mubr.f32.mxu0 0.0
      %1789 = vmatmul.mubr.f32.gmra.mxu0 %v1135
      %v1790 = vpop.f32.mrf.mxu0
      %v1791 = vadd.f32 0.0, %v1790
      %v1792 = vpop.f32.mrf.mxu0
      %1793 = vmatprep.mubr.f32.mxu0 0.0
      %1794 = vmatmul.mubr.f32.gmra.mxu0 %v1138
      %v1795 = vpop.f32.mrf.mxu0
      %v1796 = vadd.f32 0.0, %v1795
      %v1797 = vpop.f32.mrf.mxu0
      %1798 = vmatprep.mubr.f32.mxu0 0.0
      %1799 = vmatmul.mubr.f32.gmra.mxu0 %v1141
      %v1800 = vpop.f32.mrf.mxu0
      %v1801 = vadd.f32 0.0, %v1800
      %v1802 = vpop.f32.mrf.mxu0
      %1803 = vmatprep.mubr.f32.mxu0 0.0
      %1804 = vmatmul.mubr.f32.gmra.mxu0 %v1144
      %v1805 = vpop.f32.mrf.mxu0
      %v1806 = vadd.f32 0.0, %v1805
      %v1807 = vpop.f32.mrf.mxu0
      %1808 = vmatprep.mubr.f32.mxu0 0.0
      %1809 = vmatmul.mubr.f32.gmra.mxu0 %v1147
      %v1810 = vpop.f32.mrf.mxu0
      %v1811 = vadd.f32 0.0, %v1810
      %v1812 = vpop.f32.mrf.mxu0
      %1813 = vmatprep.mubr.f32.mxu0 0.0
      %1814 = vmatmul.mubr.f32.gmra.mxu0 %v1150
      %v1815 = vpop.f32.mrf.mxu0
      %v1816 = vadd.f32 0.0, %v1815
      %v1817 = vpop.f32.mrf.mxu0
      %1818 = vmatprep.mubr.f32.mxu0 0.0
      %1819 = vmatmul.mubr.f32.gmra.mxu0 %v1153
      %v1820 = vpop.f32.mrf.mxu0
      %v1821 = vadd.f32 0.0, %v1820
      %v1822 = vpop.f32.mrf.mxu0
      %1823 = vmatprep.mubr.f32.mxu0 0.0
      %1824 = vmatmul.mubr.f32.gmra.mxu0 %v1156
      %v1825 = vpop.f32.mrf.mxu0
      %v1826 = vadd.f32 0.0, %v1825
      %v1827 = vpop.f32.mrf.mxu0
      %1828 = vmatprep.mubr.f32.mxu0 0.0
      %1829 = vmatmul.mubr.f32.gmra.mxu0 %v1159
      %v1830 = vpop.f32.mrf.mxu0
      %v1831 = vadd.f32 0.0, %v1830
      %v1832 = vpop.f32.mrf.mxu0
      %1833 = vmatprep.mubr.f32.mxu0 0.0
      %1834 = vmatmul.mubr.f32.gmra.mxu0 %v1162
      %v1835 = vpop.f32.mrf.mxu0
      %v1836 = vadd.f32 0.0, %v1835
      %v1837 = vpop.f32.mrf.mxu0
      %1838 = vmatprep.mubr.f32.mxu0 0.0
      %1839 = vmatmul.mubr.f32.gmra.mxu0 %v1165
      %v1840 = vpop.f32.mrf.mxu0
      %v1841 = vadd.f32 0.0, %v1840
      %v1842 = vpop.f32.mrf.mxu0
      %1843 = vmatprep.mubr.f32.mxu0 0.0
      %1844 = vmatmul.mubr.f32.gmra.mxu0 %v1168
      %v1845 = vpop.f32.mrf.mxu0
      %v1846 = vadd.f32 0.0, %v1845
      %v1847 = vpop.f32.mrf.mxu0
      %1848 = vmatprep.mubr.f32.mxu0 0.0
      %1849 = vmatmul.mubr.f32.gmra.mxu0 %v1171
      %v1850 = vpop.f32.mrf.mxu0
      %v1851 = vadd.f32 0.0, %v1850
      %v1852 = vpop.f32.mrf.mxu0
      %1853 = vmatprep.mubr.f32.mxu0 0.0
      %1854 = vmatmul.mubr.f32.gmra.mxu0 %v1174
      %v1855 = vpop.f32.mrf.mxu0
      %v1856 = vadd.f32 0.0, %v1855
      %v1857 = vpop.f32.mrf.mxu0
      %1858 = vmatprep.mubr.f32.mxu0 0.0
      %1859 = vmatmul.mubr.f32.gmra.mxu0 %v1177
      %v1860 = vpop.f32.mrf.mxu0
      %v1861 = vadd.f32 0.0, %v1860
      %v1862 = vpop.f32.mrf.mxu0
      %1863 = vmatprep.mubr.f32.mxu0 0.0
      %1864 = vmatmul.mubr.f32.gmra.mxu0 %v1180
      %v1865 = vpop.f32.mrf.mxu0
      %v1866 = vadd.f32 0.0, %v1865
      %v1867 = vpop.f32.mrf.mxu0
      %1868 = vmatprep.mubr.f32.mxu0 0.0
      %1869 = vmatmul.mubr.f32.gmra.mxu0 %v1183
      %v1870 = vpop.f32.mrf.mxu0
      %v1871 = vadd.f32 0.0, %v1870
      %v1872 = vpop.f32.mrf.mxu0
      %1873 = vmatprep.mubr.f32.mxu0 0.0
      %1874 = vmatmul.mubr.f32.gmra.mxu0 %v1186
      %v1875 = vpop.f32.mrf.mxu0
      %v1876 = vadd.f32 0.0, %v1875
      %v1877 = vpop.f32.mrf.mxu0
      %1878 = vmatprep.mubr.f32.mxu0 0.0
      %1879 = vmatmul.mubr.f32.gmra.mxu0 %v1189
      %v1880 = vpop.f32.mrf.mxu0
      %v1881 = vadd.f32 0.0, %v1880
      %v1882 = vpop.f32.mrf.mxu0
      %1883 = vmatprep.mubr.f32.mxu0 0.0
      %1884 = vmatmul.mubr.f32.gmra.mxu0 %v1192
      %v1885 = vpop.f32.mrf.mxu0
      %v1886 = vadd.f32 0.0, %v1885
      %v1887 = vpop.f32.mrf.mxu0
      %1888 = vmatprep.mubr.f32.mxu0 0.0
      %1889 = vmatmul.mubr.f32.gmra.mxu0 %v1195
      %v1890 = vpop.f32.mrf.mxu0
      %v1891 = vadd.f32 0.0, %v1890
      %v1892 = vpop.f32.mrf.mxu0
      %1893 = vmatprep.mubr.f32.mxu0 0.0
      %1894 = vmatmul.mubr.f32.gmra.mxu0 %v1198
      %v1895 = vpop.f32.mrf.mxu0
      %v1896 = vadd.f32 0.0, %v1895
      %v1897 = vpop.f32.mrf.mxu0
      %1898 = vmatprep.mubr.f32.mxu0 0.0
      %1899 = vmatmul.mubr.f32.gmra.mxu0 %v1201
      %v1900 = vpop.f32.mrf.mxu0
      %v1901 = vadd.f32 0.0, %v1900
      %v1902 = vpop.f32.mrf.mxu0
      %1903 = vmatprep.mubr.f32.mxu0 0.0
      %1904 = vmatmul.mubr.f32.gmra.mxu0 %v1204
      %v1905 = vpop.f32.mrf.mxu0
      %v1906 = vadd.f32 0.0, %v1905
      %v1907 = vpop.f32.mrf.mxu0
      %1908 = vmatprep.mubr.f32.mxu0 0.0
      %1909 = vmatmul.mubr.f32.gmra.mxu0 %v1207
      %v1910 = vpop.f32.mrf.mxu0
      %v1911 = vadd.f32 0.0, %v1910
      %v1912 = vpop.f32.mrf.mxu0
      %1913 = vmatprep.mubr.f32.mxu0 0.0
      %1914 = vmatmul.mubr.f32.gmra.mxu0 %v1210
      %v1915 = vpop.f32.mrf.mxu0
      %v1916 = vadd.f32 0.0, %v1915
      %v1917 = vpop.f32.mrf.mxu0
      %1918 = vmatprep.mubr.f32.mxu0 0.0
      %1919 = vmatmul.mubr.f32.gmra.mxu0 %v1213
      %v1920 = vpop.f32.mrf.mxu0
      %v1921 = vadd.f32 0.0, %v1920
      %v1922 = vpop.f32.mrf.mxu0
      %1923 = vmatprep.mubr.f32.mxu0 0.0
      %1924 = vmatmul.mubr.f32.gmra.mxu0 %v1216
      %v1925 = vpop.f32.mrf.mxu0
      %v1926 = vadd.f32 0.0, %v1925
      %v1927 = vpop.f32.mrf.mxu0
      %1928 = vmatprep.mubr.f32.mxu0 0.0
      %1929 = vmatmul.mubr.f32.gmra.mxu0 %v1219
      %v1930 = vpop.f32.mrf.mxu0
      %v1931 = vadd.f32 0.0, %v1930
      %v1932 = vpop.f32.mrf.mxu0
      %1933 = vmatprep.mubr.f32.mxu0 0.0
      %1934 = vmatmul.mubr.f32.gmra.mxu0 %v1222
      %v1935 = vpop.f32.mrf.mxu0
      %v1936 = vadd.f32 0.0, %v1935
      %v1937 = vpop.f32.mrf.mxu0
      %1938 = vdwg.mxu0
      %v1939 = vadd.f32 %v1674, %v1781
      %v1940 = vadd.f32 %v1675, %v1786
      %v1941 = vadd.f32 %v1676, %v1791
      %v1942 = vadd.f32 %v1677, %v1796
      %v1943 = vadd.f32 %v1678, %v1801
      %v1944 = vadd.f32 %v1679, %v1806
      %v1945 = vadd.f32 %v1680, %v1811
      %v1946 = vadd.f32 %v1681, %v1816
      %v1947 = vadd.f32 %v1682, %v1821
      %v1948 = vadd.f32 %v1683, %v1826
      %v1949 = vadd.f32 %v1684, %v1831
      %v1950 = vadd.f32 %v1685, %v1836
      %v1951 = vadd.f32 %v1686, %v1841
      %v1952 = vadd.f32 %v1687, %v1846
      %v1953 = vadd.f32 %v1688, %v1851
      %v1954 = vadd.f32 %v1689, %v1856
      %v1955 = vadd.f32 %v1690, %v1861
      %v1956 = vadd.f32 %v1691, %v1866
      %v1957 = vadd.f32 %v1692, %v1871
      %v1958 = vadd.f32 %v1693, %v1876
      %v1959 = vadd.f32 %v1694, %v1881
      %v1960 = vadd.f32 %v1695, %v1886
      %v1961 = vadd.f32 %v1696, %v1891
      %v1962 = vadd.f32 %v1697, %v1896
      %v1963 = vadd.f32 %v1698, %v1901
      %v1964 = vadd.f32 %v1699, %v1906
      %v1965 = vadd.f32 %v1700, %v1911
      %v1966 = vadd.f32 %v1701, %v1916
      %v1967 = vadd.f32 %v1702, %v1921
      %v1968 = vadd.f32 %v1703, %v1926
      %v1969 = vadd.f32 %v1704, %v1931
      %v1970 = vadd.f32 %v1705, %v1936
      %v1971 = vmul.f32 %v1939, 0.5
      %v1972 = vmul.f32 %v1940, 0.5
      %v1973 = vmul.f32 %v1941, 0.5
      %v1974 = vmul.f32 %v1942, 0.5
      %v1975 = vmul.f32 %v1943, 0.5
      %v1976 = vmul.f32 %v1944, 0.5
      %v1977 = vmul.f32 %v1945, 0.5
      %v1978 = vmul.f32 %v1946, 0.5
      %v1979 = vtanh.pop %v1971
      %v1980 = vtanh.pop %v1972
      %v1981 = vtanh.pop %v1973
      %v1982 = vtanh.pop %v1974
      %v1983 = vtanh.pop %v1975
      %v1984 = vtanh.pop %v1976
      %v1985 = vtanh.pop %v1977
      %v1986 = vtanh.pop %v1978
      %v1987 = vmul.f32 %v1979, 0.5
      %v1988 = vmul.f32 %v1980, 0.5
      %v1989 = vmul.f32 %v1981, 0.5
      %v1990 = vmul.f32 %v1982, 0.5
      %v1991 = vmul.f32 %v1983, 0.5
      %v1992 = vmul.f32 %v1984, 0.5
      %v1993 = vmul.f32 %v1985, 0.5
      %v1994 = vmul.f32 %v1986, 0.5
      %v1995 = vadd.f32 %v1987, 0.5
      %v1996 = vadd.f32 %v1988, 0.5
      %v1997 = vadd.f32 %v1989, 0.5
      %v1998 = vadd.f32 %v1990, 0.5
      %v1999 = vadd.f32 %v1991, 0.5
      %v2000 = vadd.f32 %v1992, 0.5
      %v2001 = vadd.f32 %v1993, 0.5
      %v2002 = vadd.f32 %v1994, 0.5
      %v2003 = vmul.f32 %v1947, 0.5
      %v2004 = vmul.f32 %v1948, 0.5
      %v2005 = vmul.f32 %v1949, 0.5
      %v2006 = vmul.f32 %v1950, 0.5
      %v2007 = vmul.f32 %v1951, 0.5
      %v2008 = vmul.f32 %v1952, 0.5
      %v2009 = vmul.f32 %v1953, 0.5
      %v2010 = vmul.f32 %v1954, 0.5
      %v2011 = vtanh.pop %v2003
      %v2012 = vtanh.pop %v2004
      %v2013 = vtanh.pop %v2005
      %v2014 = vtanh.pop %v2006
      %v2015 = vtanh.pop %v2007
      %v2016 = vtanh.pop %v2008
      %v2017 = vtanh.pop %v2009
      %v2018 = vtanh.pop %v2010
      %v2019 = vmul.f32 %v2011, 0.5
      %v2020 = vmul.f32 %v2012, 0.5
      %v2021 = vmul.f32 %v2013, 0.5
      %v2022 = vmul.f32 %v2014, 0.5
      %v2023 = vmul.f32 %v2015, 0.5
      %v2024 = vmul.f32 %v2016, 0.5
      %v2025 = vmul.f32 %v2017, 0.5
      %v2026 = vmul.f32 %v2018, 0.5
      %v2027 = vadd.f32 %v2019, 0.5
      %v2028 = vadd.f32 %v2020, 0.5
      %v2029 = vadd.f32 %v2021, 0.5
      %v2030 = vadd.f32 %v2022, 0.5
      %v2031 = vadd.f32 %v2023, 0.5
      %v2032 = vadd.f32 %v2024, 0.5
      %v2033 = vadd.f32 %v2025, 0.5
      %v2034 = vadd.f32 %v2026, 0.5
      %v2035 = vtanh.pop %v1955
      %v2036 = vtanh.pop %v1956
      %v2037 = vtanh.pop %v1957
      %v2038 = vtanh.pop %v1958
      %v2039 = vtanh.pop %v1959
      %v2040 = vtanh.pop %v1960
      %v2041 = vtanh.pop %v1961
      %v2042 = vtanh.pop %v1962
      %v2043 = vmul.f32 %v1963, 0.5
      %v2044 = vmul.f32 %v1964, 0.5
      %v2045 = vmul.f32 %v1965, 0.5
      %v2046 = vmul.f32 %v1966, 0.5
      %v2047 = vmul.f32 %v1967, 0.5
      %v2048 = vmul.f32 %v1968, 0.5
      %v2049 = vmul.f32 %v1969, 0.5
      %v2050 = vmul.f32 %v1970, 0.5
      %v2051 = vtanh.pop %v2043
      %v2052 = vtanh.pop %v2044
      %v2053 = vtanh.pop %v2045
      %v2054 = vtanh.pop %v2046
      %v2055 = vtanh.pop %v2047
      %v2056 = vtanh.pop %v2048
      %v2057 = vtanh.pop %v2049
      %v2058 = vtanh.pop %v2050
      %v2059 = vmul.f32 %v2051, 0.5
      %v2060 = vmul.f32 %v2052, 0.5
      %v2061 = vmul.f32 %v2053, 0.5
      %v2062 = vmul.f32 %v2054, 0.5
      %v2063 = vmul.f32 %v2055, 0.5
      %v2064 = vmul.f32 %v2056, 0.5
      %v2065 = vmul.f32 %v2057, 0.5
      %v2066 = vmul.f32 %v2058, 0.5
      %v2067 = vadd.f32 %v2059, 0.5
      %v2068 = vadd.f32 %v2060, 0.5
      %v2069 = vadd.f32 %v2061, 0.5
      %v2070 = vadd.f32 %v2062, 0.5
      %v2071 = vadd.f32 %v2063, 0.5
      %v2072 = vadd.f32 %v2064, 0.5
      %v2073 = vadd.f32 %v2065, 0.5
      %v2074 = vadd.f32 %v2066, 0.5
      %v2075 = vld [vmem:[#allocation4] sm:$0xff]
      %v2076 = vld [vmem:[#allocation4 + $0x8] sm:$0xff]
      %v2077 = vld [vmem:[#allocation4 + $0x10] sm:$0xff]
      %v2078 = vld [vmem:[#allocation4 + $0x18] sm:$0xff]
      %v2079 = vld [vmem:[#allocation4 + $0x20] sm:$0xff]
      %v2080 = vld [vmem:[#allocation4 + $0x28] sm:$0xff]
      %v2081 = vld [vmem:[#allocation4 + $0x30] sm:$0xff]
      %v2082 = vld [vmem:[#allocation4 + $0x38] sm:$0xff]
      %v2083 = vmul.f32 %v2027, %v2075
      %v2084 = vmul.f32 %v2028, %v2076
      %v2085 = vmul.f32 %v2029, %v2077
      %v2086 = vmul.f32 %v2030, %v2078
      %v2087 = vmul.f32 %v2031, %v2079
      %v2088 = vmul.f32 %v2032, %v2080
      %v2089 = vmul.f32 %v2033, %v2081
      %v2090 = vmul.f32 %v2034, %v2082
      %v2091 = vmul.f32 %v1995, %v2035
      %v2092 = vmul.f32 %v1996, %v2036
      %v2093 = vmul.f32 %v1997, %v2037
      %v2094 = vmul.f32 %v1998, %v2038
      %v2095 = vmul.f32 %v1999, %v2039
      %v2096 = vmul.f32 %v2000, %v2040
      %v2097 = vmul.f32 %v2001, %v2041
      %v2098 = vmul.f32 %v2002, %v2042
      %v2099 = vadd.f32 %v2083, %v2091
      %v2100 = vadd.f32 %v2084, %v2092
      %v2101 = vadd.f32 %v2085, %v2093
      %v2102 = vadd.f32 %v2086, %v2094
      %v2103 = vadd.f32 %v2087, %v2095
      %v2104 = vadd.f32 %v2088, %v2096
      %v2105 = vadd.f32 %v2089, %v2097
      %v2106 = vadd.f32 %v2090, %v2098
      %v2107 = vtanh.pop %v2099
      %v2108 = vtanh.pop %v2100
      %v2109 = vtanh.pop %v2101
      %v2110 = vtanh.pop %v2102
      %v2111 = vtanh.pop %v2103
      %v2112 = vtanh.pop %v2104
      %v2113 = vtanh.pop %v2105
      %v2114 = vtanh.pop %v2106
      %v2115 = vmul.f32 %v2067, %v2107
      %v2116 = vmul.f32 %v2068, %v2108
      %v2117 = vmul.f32 %v2069, %v2109
      %v2118 = vmul.f32 %v2070, %v2110
      %v2119 = vmul.f32 %v2071, %v2111
      %v2120 = vmul.f32 %v2072, %v2112
      %v2121 = vmul.f32 %v2073, %v2113
      %v2122 = vmul.f32 %v2074, %v2114
      %2123 = vst.msk [vmem:[#allocation4] sm:$0xff] %vm198, %v2099
      %2124 = vst.msk [vmem:[#allocation4 + $0x8] sm:$0xff] %vm198, %v2100
      %2125 = vst.msk [vmem:[#allocation4 + $0x10] sm:$0xff] %vm198, %v2101
      %2126 = vst.msk [vmem:[#allocation4 + $0x18] sm:$0xff] %vm198, %v2102
      %2127 = vst.msk [vmem:[#allocation4 + $0x20] sm:$0xff] %vm198, %v2103
      %2128 = vst.msk [vmem:[#allocation4 + $0x28] sm:$0xff] %vm198, %v2104
      %2129 = vst.msk [vmem:[#allocation4 + $0x30] sm:$0xff] %vm198, %v2105
      %2130 = vst.msk [vmem:[#allocation4 + $0x38] sm:$0xff] %vm198, %v2106
      %2131 = vst.msk [vmem:[#allocation3] sm:$0xff] %vm198, %v2115
      %2132 = vst.msk [vmem:[#allocation3 + $0x8] sm:$0xff] %vm198, %v2116
      %2133 = vst.msk [vmem:[#allocation3 + $0x10] sm:$0xff] %vm198, %v2117
      %2134 = vst.msk [vmem:[#allocation3 + $0x18] sm:$0xff] %vm198, %v2118
      %2135 = vst.msk [vmem:[#allocation3 + $0x20] sm:$0xff] %vm198, %v2119
      %2136 = vst.msk [vmem:[#allocation3 + $0x28] sm:$0xff] %vm198, %v2120
      %2137 = vst.msk [vmem:[#allocation3 + $0x30] sm:$0xff] %vm198, %v2121
      %2138 = vst.msk [vmem:[#allocation3 + $0x38] sm:$0xff] %vm198, %v2122
      %2143 = vrot.lane.b32.xlu0 %v2115, 114
      %v2144 = vpop.permute.xlu0 %2143
      %2145 = vrot.lane.b32.xlu0 %v2116, 114
      %v2146 = vpop.permute.xlu0 %2145
      %2147 = vrot.lane.b32.xlu0 %v2117, 114
      %v2148 = vpop.permute.xlu0 %2147
      %2149 = vrot.lane.b32.xlu0 %v2118, 114
      %v2150 = vpop.permute.xlu0 %2149
      %s2155 = scalar_lea.vmem %s197, 64
      %2156 = vst.msk [vmem:[%s2155] sm:$0xff] %vm1665, %v2144
      %2157 = vst.msk [vmem:[%s2155 + $0x8] sm:$0xff] %vm1665, %v2146
      %2158 = vst.msk [vmem:[%s2155 + $0x10] sm:$0xff] %vm1665, %v2148
      %2159 = vst.msk [vmem:[%s2155 + $0x18] sm:$0xff] %vm1665, %v2150
      %2160 = vst.msk [vmem:[%s2155 + $0x20] sm:$0xff] %vm1665, %v2119
      %2161 = vst.msk [vmem:[%s2155 + $0x28] sm:$0xff] %vm1665, %v2120
      %2162 = vst.msk [vmem:[%s2155 + $0x30] sm:$0xff] %vm1665, %v2121
      %2163 = vst.msk [vmem:[%s2155 + $0x38] sm:$0xff] %vm1665, %v2122
      %p2164 = scmp.lt.s32.totalorder %s15, 1
      %s2165 = scalar_select %p2164, %s15, 1
      %s2166 = smul.addr %s2165, 16
      %s2167 = smul.addr %s2166, 8
      %s2168 = scalar_lea.vmem %s4, %s2167
      // Predicated region
      $region37: #{tpu_custom_call.1} parent=35 // pred_check
        %p2169 = pneg %p122
      $region38: #{tpu_custom_call.1} parent=35 // pred_check_branch
        %2171 = sbr.rel (%p2169) target = $region40
      $region39: #{tpu_custom_call.1} parent=35 // pred_region
        _
      $region40: #{tpu_custom_call.1} parent=35 // pred_fallthru
        _
    $region36: #{tpu_custom_call.1} parent=5 // pred_fallthru
      _
    %p2172 = scmp.le.s32.totalorder 2, %s10
    // Predicated region
    $region41: #{tpu_custom_call.1} parent=5 // pred_check
      %p2173 = pneg %p2172
    $region42: #{tpu_custom_call.1} parent=5 // pred_check_branch
      %2175 = sbr.rel (%p2173) target = $region44
    $region43: #{tpu_custom_call.1} parent=5 // pred_region
      %s2176 = ssub.s32 %s10, 2
      // Predicated region
      $region45: #{tpu_custom_call.1} parent=43 // pred_check
        %p2177 = pneg %p128
      $region46: #{tpu_custom_call.1} parent=43 // pred_check_branch
        %2179 = sbr.rel (%p2177) target = $region48
      $region47: #{tpu_custom_call.1} parent=43 // pred_region
        %p2180 = scmp.lt.s32.totalorder %s16, 1
        %s2181 = scalar_select %p2180, %s16, 1
        %s2182 = smul.addr %s2181, 16
        %s2183 = smul.addr %s2182, 8
        %s2184 = scalar_lea.vmem %s4, %s2183
      $region48: #{tpu_custom_call.1} parent=43 // pred_fallthru
        _
    $region44: #{tpu_custom_call.1} parent=5 // pred_fallthru
      _
  $region6: #{tpu_custom_call.1} parent=0 // loop_footer
    %s14 = sadd.s32 1, %s10
  $region7: #{tpu_custom_call.1} parent=0 // loop_footer_branch
    %9 = sbr.rel target = $region3
  $region8: #{tpu_custom_call.1} parent=0 // loop_exit
    _

</llo_original>
